<compile_context>
chip_gen: v7x
topology: tpu7x:2x2x1
jax: 0.10.0
libtpu: 0.0.40
codegen_flags: <defaults>
</compile_context>

<pallas_src>
import math

import jax
import jax.numpy as jnp
from jax.experimental import pallas as pl
from jax.experimental.pallas import tpu as pltpu

_BN_EPS = 1e-5
# Conservative scoped-VMEM budget: safe on v5e/v6e (128 MiB phys) and v7x (64 MiB phys).
_VMEM_LIMIT = 32 * 1024 * 1024
_COMPUTE_DTYPE = jnp.bfloat16   # MXU-native operand dtype on v6e/v7x; f32 accumulation.


def _round_up(x, m):
    return ((x + m - 1) // m) * m


# -----------------------------------------------------------------------------
# Fused forward kernel (one batch tile per grid step).
# -----------------------------------------------------------------------------
def _fused_kernel(
    # batch-tiled inputs
    res_ref, att_ref, conf_ref,
    # image branch params (BN-folded, pre-transposed, bf16 weights / f32 biases)
    w_img1_ref, b_img1_ref, w_img2_ref, b_img2_ref,
    w_rec_ref, b_rec_ref,
    w_bin_a_ref, w_bin_b_ref, b_bin_ref,
    w_cls_ref, b_cls_ref,
    # text branch params
    w_txt1_ref, b_txt1_ref, w_txt2_ref, b_txt2_ref,
    w_tc1_ref, b_tc1_ref, w_tc2_ref, b_tc2_ref,
    w_cat_a_ref, w_cat_b_ref, b_cat_ref,
    # outputs
    img_embed_ref, att_concat_ref, img_cls_ref, img_bin_ref, img_rec_ref,
):
    def dot(x_f32, w_ref):
        # bf16 operands on the MXU, f32 accumulation.
        return jnp.dot(x_f32.astype(w_ref.dtype), w_ref[...],
                       preferred_element_type=jnp.float32)

    relu = lambda v: jnp.maximum(v, 0.0)

    # ---- image branch ----
    res = res_ref[...].astype(jnp.float32)
    h1 = relu(dot(res, w_img1_ref) + b_img1_ref[...])            # fc1+BN+ReLU (+dropout=id)
    img_embed = dot(h1, w_img2_ref) + b_img2_ref[...]            # fc2+BN
    img_rec = relu(dot(img_embed, w_rec_ref) + b_rec_ref[...])   # fc_img_reconst + ReLU

    # fc_binary(ReLU(cat(img_embed, img_rec))) as two accumulating dots
    # (img_rec is already >= 0, so no extra ReLU on that half).
    img_bin = (dot(relu(img_embed), w_bin_a_ref)
               + dot(img_rec, w_bin_b_ref) + b_bin_ref[...])

    # fc_cls + log-softmax (row-wise; full class axis resident in this tile).
    logits = dot(img_embed, w_cls_ref) + b_cls_ref[...]
    m = jnp.max(logits, axis=-1, keepdims=True)
    s = logits - m
    lse = jnp.log(jnp.sum(jnp.exp(s), axis=-1, keepdims=True))
    img_cls = s - lse

    # ---- text branch ----
    att = att_ref[...].astype(jnp.float32)
    conf = conf_ref[...].astype(jnp.float32)
    t1 = relu(dot(att, w_txt1_ref) + b_txt1_ref[...])
    text_embed = dot(t1, w_txt2_ref) + b_txt2_ref[...]
    c1 = relu(dot(conf, w_tc1_ref) + b_tc1_ref[...])
    text_conf = dot(c1, w_tc2_ref) + b_tc2_ref[...]

    # BN(fc_concat(ReLU(cat(text_embed, text_conf)))) with BN folded, as two dots.
    att_concat = (dot(relu(text_embed), w_cat_a_ref)
                  + dot(relu(text_conf), w_cat_b_ref) + b_cat_ref[...])

    # ---- writes ----
    img_embed_ref[...] = img_embed.astype(img_embed_ref.dtype)
    att_concat_ref[...] = att_concat.astype(att_concat_ref.dtype)
    img_cls_ref[...] = img_cls.astype(img_cls_ref.dtype)
    img_bin_ref[...] = img_bin.astype(img_bin_ref.dtype)
    img_rec_ref[...] = img_rec.astype(img_rec_ref.dtype)


# -----------------------------------------------------------------------------
# Parameter init (PyTorch layer shapes) + one-time prep (BN fold + transpose +
# bf16 cast + concat-weight split).
# -----------------------------------------------------------------------------
def _init_linear(key, out_dim, in_dim):
    kw, kb = jax.random.split(key)
    bound = 1.0 / math.sqrt(in_dim)
    return {
        "w": jax.random.uniform(kw, (out_dim, in_dim), jnp.float32, -bound, bound),
        "b": jax.random.uniform(kb, (out_dim,), jnp.float32, -bound, bound),
    }


def _init_bn(key, dim):
    k1, k2, k3 = jax.random.split(key, 3)
    return {
        "gamma": jax.random.uniform(k1, (dim,), jnp.float32, 0.8, 1.2),
        "beta": jax.random.uniform(k2, (dim,), jnp.float32, -0.1, 0.1),
        "mean": jax.random.uniform(k3, (dim,), jnp.float32, -0.1, 0.1),
        "var": jnp.full((dim,), 1.0, jnp.float32),
    }


def init_params(key, res_size, att_size, nclass_all, fc1, fc2, nclass):
    keys = jax.random.split(key, 20)
    return {
        "fc1_img": _init_linear(keys[0], fc1, res_size),  "bn1_img": _init_bn(keys[1], fc1),
        "fc2_img": _init_linear(keys[2], fc2, fc1),        "bn2_img": _init_bn(keys[3], fc2),
        "fc1_txt": _init_linear(keys[4], fc1, att_size),   "bn1_txt": _init_bn(keys[5], fc1),
        "fc2_txt": _init_linear(keys[6], fc2, fc1),        "bn2_txt": _init_bn(keys[7], fc2),
        "fc1_tc":  _init_linear(keys[8], fc1, nclass_all), "bn1_tc":  _init_bn(keys[9], fc1),
        "fc2_tc":  _init_linear(keys[10], fc2, fc1),       "bn2_tc":  _init_bn(keys[11], fc2),
        "fc_cat":  _init_linear(keys[12], fc2, fc2 * 2),   "bn_cat":  _init_bn(keys[13], fc2),
        "fc_cls":  _init_linear(keys[14], nclass, fc2),
        "fc_bin":  _init_linear(keys[15], att_size, fc2 + res_size),
        "fc_rec":  _init_linear(keys[16], res_size, fc2),
    }


def _fold_bn(lin, bn):
    """Fold eval-mode BatchNorm into the preceding Linear; transpose + bf16 cast."""
    scale = bn["gamma"] / jnp.sqrt(bn["var"] + _BN_EPS)
    w_f = lin["w"] * scale[:, None]                        # (out, in)
    b_f = (lin["b"] - bn["mean"]) * scale + bn["beta"]
    return (jnp.transpose(w_f).astype(_COMPUTE_DTYPE),     # (in, out) bf16
            b_f[None, :].astype(jnp.float32))              # (1, out)  f32


def _prep(lin):
    return (jnp.transpose(lin["w"]).astype(_COMPUTE_DTYPE),
            lin["b"][None, :].astype(jnp.float32))


def prepare_params(params):
    """One-time prep: BN fold, transpose, bf16 cast, split concat weights."""
    fc2 = params["fc2_img"]["w"].shape[0]
    p = {}
    p["img1_wt"], p["img1_b"] = _fold_bn(params["fc1_img"], params["bn1_img"])
    p["img2_wt"], p["img2_b"] = _fold_bn(params["fc2_img"], params["bn2_img"])
    p["txt1_wt"], p["txt1_b"] = _fold_bn(params["fc1_txt"], params["bn1_txt"])
    p["txt2_wt"], p["txt2_b"] = _fold_bn(params["fc2_txt"], params["bn2_txt"])
    p["tc1_wt"],  p["tc1_b"]  = _fold_bn(params["fc1_tc"],  params["bn1_tc"])
    p["tc2_wt"],  p["tc2_b"]  = _fold_bn(params["fc2_tc"],  params["bn2_tc"])
    p["rec_wt"],  p["rec_b"]  = _prep(params["fc_rec"])
    p["cls_wt"],  p["cls_b"]  = _prep(params["fc_cls"])

    # Split concatenation weights -> two accumulating dots (no concat arrays).
    cat_wt, p["cat_b"] = _fold_bn(params["fc_cat"], params["bn_cat"])   # (2*fc2, fc2)
    p["cat_wt_a"] = cat_wt[:fc2]     # text_embed half
    p["cat_wt_b"] = cat_wt[fc2:]     # text_confuse_embed half

    bin_wt, p["bin_b"] = _prep(params["fc_bin"])                        # (fc2+res, att)
    p["bin_wt_a"] = bin_wt[:fc2]     # img_embed_com half
    p["bin_wt_b"] = bin_wt[fc2:]     # img_reconst half (already ReLU'd activation)
    return p


# -----------------------------------------------------------------------------
# Forward pass (eval mode): one pallas_call for the whole network.
# -----------------------------------------------------------------------------
def mlp_oneway_att_confuse_forward(p, res, att, att_confuse, *, tm_max=256):
    M, RES = res.shape
    ATT = att.shape[1]
    NCA = att_confuse.shape[1]
    FC2 = p["img2_b"].shape[1]
    NCLASS = p["cls_b"].shape[1]

    # Batch tile: multiple of 8 sublanes; pad batch (zeros) instead of falling
    # back to odd full-dim blocks.
    tm = min(_round_up(max(M, 1), 8), tm_max)
    M_pad = _round_up(M, tm)
    if M_pad != M:
        pad = ((0, M_pad - M), (0, 0))
        res = jnp.pad(res, pad)
        att = jnp.pad(att, pad)
        att_confuse = jnp.pad(att_confuse, pad)
    grid = (M_pad // tm,)

    def row_spec(d):
        return pl.BlockSpec((tm, d), lambda i: (i, 0))

    def full_spec(a):
        return pl.BlockSpec(a.shape, lambda i: (0, 0))

    weight_order = [
        "img1_wt", "img1_b", "img2_wt", "img2_b",
        "rec_wt", "rec_b",
        "bin_wt_a", "bin_wt_b", "bin_b",
        "cls_wt", "cls_b",
        "txt1_wt", "txt1_b", "txt2_wt", "txt2_b",
        "tc1_wt", "tc1_b", "tc2_wt", "tc2_b",
        "cat_wt_a", "cat_wt_b", "cat_b",
    ]
    weights = [p[k] for k in weight_order]

    out_dtype = res.dtype
    out_shapes = (
        jax.ShapeDtypeStruct((M_pad, FC2), out_dtype),      # img_embed_com
        jax.ShapeDtypeStruct((M_pad, FC2), out_dtype),      # att_concat
        jax.ShapeDtypeStruct((M_pad, NCLASS), out_dtype),   # img_cls
        jax.ShapeDtypeStruct((M_pad, ATT), out_dtype),      # img_binary
        jax.ShapeDtypeStruct((M_pad, RES), out_dtype),      # img_reconst
    )

    outs = pl.pallas_call(
        _fused_kernel,
        out_shape=out_shapes,
        grid_spec=pltpu.PrefetchScalarGridSpec(
            num_scalar_prefetch=0,
            grid=grid,
            in_specs=[row_spec(RES), row_spec(ATT), row_spec(NCA)]
                     + [full_spec(w) for w in weights],
            out_specs=[row_spec(FC2), row_spec(FC2), row_spec(NCLASS),
                       row_spec(ATT), row_spec(RES)]),
        compiler_params=pltpu.CompilerParams(
            dimension_semantics=("parallel",),
            vmem_limit_bytes=_VMEM_LIMIT),
    )(res, att, att_confuse, *weights)

    if M_pad != M:
        outs = tuple(o[:M] for o in outs)
    return outs


if __name__ == "__main__":
    # Small, TPU-friendly config (lane dims multiples of 128):
    #   opt.resSize=256, opt.attSize=128, opt.nclass_all=128,
    #   opt.fc1_size=256, opt.fc2_size=128, nclass=128, batch=2
    RES, ATT, NCLASS_ALL, FC1, FC2, NCLASS, BATCH = 256, 128, 128, 256, 128, 128, 2

    key = jax.random.PRNGKey(0)
    k_param, k_res, k_att, k_conf = jax.random.split(key, 4)

    raw_params = init_params(k_param, RES, ATT, NCLASS_ALL, FC1, FC2, NCLASS)
    params = prepare_params(raw_params)   # fold BN + transpose + bf16 + split, once

    res = jax.random.normal(k_res, (BATCH, RES), jnp.float32)
    att = jax.random.normal(k_att, (BATCH, ATT), jnp.float32)
    att_confuse = jax.random.normal(k_conf, (BATCH, NCLASS_ALL), jnp.float32)

    fwd = jax.jit(mlp_oneway_att_confuse_forward)
    img_embed_com, att_concat, img_cls, img_binary, img_reconst = jax.block_until_ready(
        fwd(params, res, att, att_confuse))

    assert img_embed_com.shape == (BATCH, FC2), img_embed_com.shape
    assert att_concat.shape == (BATCH, FC2), att_concat.shape
    assert img_cls.shape == (BATCH, NCLASS), img_cls.shape
    assert img_binary.shape == (BATCH, ATT), img_binary.shape
    assert img_reconst.shape == (BATCH, RES), img_reconst.shape
    for t in (img_embed_com, att_concat, img_cls, img_binary, img_reconst):
        assert bool(jnp.all(jnp.isfinite(t)))
    # img_reconst passed through ReLU -> non-negative
    assert bool(jnp.all(img_reconst >= 0.0))
    # log_softmax rows must sum to ~1 in prob space
    assert bool(jnp.allclose(jnp.sum(jnp.exp(img_cls), axis=1), 1.0, atol=1e-4))
    print("KERNEL_OK")
</pallas_src>

<mosaic_0001>
module attributes {stable_mosaic.version = 11 : i64} {
  func.func @_fused_kernel(%arg0: i32, %arg1: memref<8x256xf32, #tpu.memory_space<vmem>>, %arg2: memref<8x128xf32, #tpu.memory_space<vmem>>, %arg3: memref<8x128xf32, #tpu.memory_space<vmem>>, %arg4: memref<256x256xbf16, #tpu.memory_space<vmem>>, %arg5: memref<1x256xf32, #tpu.memory_space<vmem>>, %arg6: memref<256x128xbf16, #tpu.memory_space<vmem>>, %arg7: memref<1x128xf32, #tpu.memory_space<vmem>>, %arg8: memref<128x256xbf16, #tpu.memory_space<vmem>>, %arg9: memref<1x256xf32, #tpu.memory_space<vmem>>, %arg10: memref<128x128xbf16, #tpu.memory_space<vmem>>, %arg11: memref<256x128xbf16, #tpu.memory_space<vmem>>, %arg12: memref<1x128xf32, #tpu.memory_space<vmem>>, %arg13: memref<128x128xbf16, #tpu.memory_space<vmem>>, %arg14: memref<1x128xf32, #tpu.memory_space<vmem>>, %arg15: memref<128x256xbf16, #tpu.memory_space<vmem>>, %arg16: memref<1x256xf32, #tpu.memory_space<vmem>>, %arg17: memref<256x128xbf16, #tpu.memory_space<vmem>>, %arg18: memref<1x128xf32, #tpu.memory_space<vmem>>, %arg19: memref<128x256xbf16, #tpu.memory_space<vmem>>, %arg20: memref<1x256xf32, #tpu.memory_space<vmem>>, %arg21: memref<256x128xbf16, #tpu.memory_space<vmem>>, %arg22: memref<1x128xf32, #tpu.memory_space<vmem>>, %arg23: memref<128x128xbf16, #tpu.memory_space<vmem>>, %arg24: memref<128x128xbf16, #tpu.memory_space<vmem>>, %arg25: memref<1x128xf32, #tpu.memory_space<vmem>>, %arg26: memref<8x128xf32, #tpu.memory_space<vmem>>, %arg27: memref<8x128xf32, #tpu.memory_space<vmem>>, %arg28: memref<8x128xf32, #tpu.memory_space<vmem>>, %arg29: memref<8x128xf32, #tpu.memory_space<vmem>>, %arg30: memref<8x256xf32, #tpu.memory_space<vmem>>) attributes {dimension_semantics = [#tpu.dimension_semantics<parallel>], iteration_bounds = array<i64: 1>, scalar_prefetch = 0 : i64, scratch_operands = 0 : i64, tpu.core_type = #tpu.core_type<tc>, window_params = [{transform_indices = @transform_0, window_bounds = array<i64: 8, 256>}, {transform_indices = @transform_1, window_bounds = array<i64: 8, 128>}, {transform_indices = @transform_2, window_bounds = array<i64: 8, 128>}, {pipeline_mode = #tpu.pipeline_mode<synchronous>, transform_indices = @transform_3, window_bounds = array<i64: 256, 256>}, {pipeline_mode = #tpu.pipeline_mode<synchronous>, transform_indices = @transform_4, window_bounds = array<i64: 1, 256>}, {pipeline_mode = #tpu.pipeline_mode<synchronous>, transform_indices = @transform_5, window_bounds = array<i64: 256, 128>}, {pipeline_mode = #tpu.pipeline_mode<synchronous>, transform_indices = @transform_6, window_bounds = array<i64: 1, 128>}, {pipeline_mode = #tpu.pipeline_mode<synchronous>, transform_indices = @transform_7, window_bounds = array<i64: 128, 256>}, {pipeline_mode = #tpu.pipeline_mode<synchronous>, transform_indices = @transform_8, window_bounds = array<i64: 1, 256>}, {pipeline_mode = #tpu.pipeline_mode<synchronous>, transform_indices = @transform_9, window_bounds = array<i64: 128, 128>}, {pipeline_mode = #tpu.pipeline_mode<synchronous>, transform_indices = @transform_10, window_bounds = array<i64: 256, 128>}, {pipeline_mode = #tpu.pipeline_mode<synchronous>, transform_indices = @transform_11, window_bounds = array<i64: 1, 128>}, {pipeline_mode = #tpu.pipeline_mode<synchronous>, transform_indices = @transform_12, window_bounds = array<i64: 128, 128>}, {pipeline_mode = #tpu.pipeline_mode<synchronous>, transform_indices = @transform_13, window_bounds = array<i64: 1, 128>}, {pipeline_mode = #tpu.pipeline_mode<synchronous>, transform_indices = @transform_14, window_bounds = array<i64: 128, 256>}, {pipeline_mode = #tpu.pipeline_mode<synchronous>, transform_indices = @transform_15, window_bounds = array<i64: 1, 256>}, {pipeline_mode = #tpu.pipeline_mode<synchronous>, transform_indices = @transform_16, window_bounds = array<i64: 256, 128>}, {pipeline_mode = #tpu.pipeline_mode<synchronous>, transform_indices = @transform_17, window_bounds = array<i64: 1, 128>}, {pipeline_mode = #tpu.pipeline_mode<synchronous>, transform_indices = @transform_18, window_bounds = array<i64: 128, 256>}, {pipeline_mode = #tpu.pipeline_mode<synchronous>, transform_indices = @transform_19, window_bounds = array<i64: 1, 256>}, {pipeline_mode = #tpu.pipeline_mode<synchronous>, transform_indices = @transform_20, window_bounds = array<i64: 256, 128>}, {pipeline_mode = #tpu.pipeline_mode<synchronous>, transform_indices = @transform_21, window_bounds = array<i64: 1, 128>}, {pipeline_mode = #tpu.pipeline_mode<synchronous>, transform_indices = @transform_22, window_bounds = array<i64: 128, 128>}, {pipeline_mode = #tpu.pipeline_mode<synchronous>, transform_indices = @transform_23, window_bounds = array<i64: 128, 128>}, {pipeline_mode = #tpu.pipeline_mode<synchronous>, transform_indices = @transform_24, window_bounds = array<i64: 1, 128>}, {transform_indices = @transform_25, window_bounds = array<i64: 8, 128>}, {transform_indices = @transform_26, window_bounds = array<i64: 8, 128>}, {transform_indices = @transform_27, window_bounds = array<i64: 8, 128>}, {transform_indices = @transform_28, window_bounds = array<i64: 8, 128>}, {transform_indices = @transform_29, window_bounds = array<i64: 8, 256>}]} {
    %c0 = arith.constant 0 : index
    %c0_0 = arith.constant 0 : index
    %0 = vector.load %arg1[%c0, %c0_0] : memref<8x256xf32, #tpu.memory_space<vmem>>, vector<8x256xf32>
    %1 = arith.truncf %0 : vector<8x256xf32> to vector<8x256xbf16>
    %c0_1 = arith.constant 0 : index
    %c0_2 = arith.constant 0 : index
    %2 = vector.load %arg4[%c0_1, %c0_2] : memref<256x256xbf16, #tpu.memory_space<vmem>>, vector<256x256xbf16>
    %cst = arith.constant dense<0.000000e+00> : vector<8x256xf32>
    %3 = tpu.matmul %1, %2, %cst {dimension_numbers = #tpu.dot_dimension_numbers<[1], [0], [0], [1], [0, 0, 1, 1], [], []>} : vector<8x256xbf16>, vector<256x256xbf16>, vector<8x256xf32> -> vector<8x256xf32>
    %c0_3 = arith.constant 0 : index
    %c0_4 = arith.constant 0 : index
    %4 = vector.load %arg5[%c0_3, %c0_4] : memref<1x256xf32, #tpu.memory_space<vmem>>, vector<1x256xf32>
    %5 = vector.broadcast %4 : vector<1x256xf32> to vector<8x256xf32>
    %6 = arith.addf %3, %5 : vector<8x256xf32>
    %cst_5 = arith.constant 0.000000e+00 : f32
    %7 = vector.broadcast %cst_5 : f32 to vector<8x256xf32>
    %8 = arith.maximumf %6, %7 : vector<8x256xf32>
    %9 = arith.truncf %8 : vector<8x256xf32> to vector<8x256xbf16>
    %c0_6 = arith.constant 0 : index
    %c0_7 = arith.constant 0 : index
    %10 = vector.load %arg6[%c0_6, %c0_7] : memref<256x128xbf16, #tpu.memory_space<vmem>>, vector<256x128xbf16>
    %cst_8 = arith.constant dense<0.000000e+00> : vector<8x128xf32>
    %11 = tpu.matmul %9, %10, %cst_8 {dimension_numbers = #tpu.dot_dimension_numbers<[1], [0], [0], [1], [0, 0, 1, 1], [], []>} : vector<8x256xbf16>, vector<256x128xbf16>, vector<8x128xf32> -> vector<8x128xf32>
    %c0_9 = arith.constant 0 : index
    %c0_10 = arith.constant 0 : index
    %12 = vector.load %arg7[%c0_9, %c0_10] : memref<1x128xf32, #tpu.memory_space<vmem>>, vector<1x128xf32>
    %13 = vector.broadcast %12 : vector<1x128xf32> to vector<8x128xf32>
    %14 = arith.addf %11, %13 : vector<8x128xf32>
    %15 = arith.truncf %14 : vector<8x128xf32> to vector<8x128xbf16>
    %c0_11 = arith.constant 0 : index
    %c0_12 = arith.constant 0 : index
    %16 = vector.load %arg8[%c0_11, %c0_12] : memref<128x256xbf16, #tpu.memory_space<vmem>>, vector<128x256xbf16>
    %cst_13 = arith.constant dense<0.000000e+00> : vector<8x256xf32>
    %17 = tpu.matmul %15, %16, %cst_13 {dimension_numbers = #tpu.dot_dimension_numbers<[1], [0], [0], [1], [0, 0, 1, 1], [], []>} : vector<8x128xbf16>, vector<128x256xbf16>, vector<8x256xf32> -> vector<8x256xf32>
    %c0_14 = arith.constant 0 : index
    %c0_15 = arith.constant 0 : index
    %18 = vector.load %arg9[%c0_14, %c0_15] : memref<1x256xf32, #tpu.memory_space<vmem>>, vector<1x256xf32>
    %19 = vector.broadcast %18 : vector<1x256xf32> to vector<8x256xf32>
    %20 = arith.addf %17, %19 : vector<8x256xf32>
    %cst_16 = arith.constant 0.000000e+00 : f32
    %21 = vector.broadcast %cst_16 : f32 to vector<8x256xf32>
    %22 = arith.maximumf %20, %21 : vector<8x256xf32>
    %cst_17 = arith.constant 0.000000e+00 : f32
    %23 = vector.broadcast %cst_17 : f32 to vector<8x128xf32>
    %24 = arith.maximumf %14, %23 : vector<8x128xf32>
    %25 = arith.truncf %24 : vector<8x128xf32> to vector<8x128xbf16>
    %c0_18 = arith.constant 0 : index
    %c0_19 = arith.constant 0 : index
    %26 = vector.load %arg10[%c0_18, %c0_19] : memref<128x128xbf16, #tpu.memory_space<vmem>>, vector<128x128xbf16>
    %cst_20 = arith.constant dense<0.000000e+00> : vector<8x128xf32>
    %27 = tpu.matmul %25, %26, %cst_20 {dimension_numbers = #tpu.dot_dimension_numbers<[1], [0], [0], [1], [0, 0, 1, 1], [], []>} : vector<8x128xbf16>, vector<128x128xbf16>, vector<8x128xf32> -> vector<8x128xf32>
    %28 = arith.truncf %22 : vector<8x256xf32> to vector<8x256xbf16>
    %c0_21 = arith.constant 0 : index
    %c0_22 = arith.constant 0 : index
    %29 = vector.load %arg11[%c0_21, %c0_22] : memref<256x128xbf16, #tpu.memory_space<vmem>>, vector<256x128xbf16>
    %cst_23 = arith.constant dense<0.000000e+00> : vector<8x128xf32>
    %30 = tpu.matmul %28, %29, %cst_23 {dimension_numbers = #tpu.dot_dimension_numbers<[1], [0], [0], [1], [0, 0, 1, 1], [], []>} : vector<8x256xbf16>, vector<256x128xbf16>, vector<8x128xf32> -> vector<8x128xf32>
    %31 = arith.addf %27, %30 : vector<8x128xf32>
    %c0_24 = arith.constant 0 : index
    %c0_25 = arith.constant 0 : index
    %32 = vector.load %arg12[%c0_24, %c0_25] : memref<1x128xf32, #tpu.memory_space<vmem>>, vector<1x128xf32>
    %33 = vector.broadcast %32 : vector<1x128xf32> to vector<8x128xf32>
    %34 = arith.addf %31, %33 : vector<8x128xf32>
    %35 = arith.truncf %14 : vector<8x128xf32> to vector<8x128xbf16>
    %c0_26 = arith.constant 0 : index
    %c0_27 = arith.constant 0 : index
    %36 = vector.load %arg13[%c0_26, %c0_27] : memref<128x128xbf16, #tpu.memory_space<vmem>>, vector<128x128xbf16>
    %cst_28 = arith.constant dense<0.000000e+00> : vector<8x128xf32>
    %37 = tpu.matmul %35, %36, %cst_28 {dimension_numbers = #tpu.dot_dimension_numbers<[1], [0], [0], [1], [0, 0, 1, 1], [], []>} : vector<8x128xbf16>, vector<128x128xbf16>, vector<8x128xf32> -> vector<8x128xf32>
    %c0_29 = arith.constant 0 : index
    %c0_30 = arith.constant 0 : index
    %38 = vector.load %arg14[%c0_29, %c0_30] : memref<1x128xf32, #tpu.memory_space<vmem>>, vector<1x128xf32>
    %39 = vector.broadcast %38 : vector<1x128xf32> to vector<8x128xf32>
    %40 = arith.addf %37, %39 : vector<8x128xf32>
    %cst_31 = arith.constant dense<0xFF800000> : vector<8xf32>
    %41 = vector.multi_reduction <maximumf>, %40, %cst_31 [1] : vector<8x128xf32> to vector<8xf32>
    %42 = vector.shape_cast %41 : vector<8xf32> to vector<8x1xf32>
    %43 = vector.broadcast %42 : vector<8x1xf32> to vector<8x128xf32>
    %44 = arith.subf %40, %43 : vector<8x128xf32>
    %45 = math.exp %44 : vector<8x128xf32>
    %cst_32 = arith.constant dense<0.000000e+00> : vector<8xf32>
    %46 = vector.multi_reduction <add>, %45, %cst_32 [1] : vector<8x128xf32> to vector<8xf32>
    %47 = vector.shape_cast %46 : vector<8xf32> to vector<8x1xf32>
    %48 = math.log %47 : vector<8x1xf32>
    %49 = vector.broadcast %48 : vector<8x1xf32> to vector<8x128xf32>
    %50 = arith.subf %44, %49 : vector<8x128xf32>
    %c0_33 = arith.constant 0 : index
    %c0_34 = arith.constant 0 : index
    %51 = vector.load %arg2[%c0_33, %c0_34] : memref<8x128xf32, #tpu.memory_space<vmem>>, vector<8x128xf32>
    %c0_35 = arith.constant 0 : index
    %c0_36 = arith.constant 0 : index
    %52 = vector.load %arg3[%c0_35, %c0_36] : memref<8x128xf32, #tpu.memory_space<vmem>>, vector<8x128xf32>
    %53 = arith.truncf %51 : vector<8x128xf32> to vector<8x128xbf16>
    %c0_37 = arith.constant 0 : index
    %c0_38 = arith.constant 0 : index
    %54 = vector.load %arg15[%c0_37, %c0_38] : memref<128x256xbf16, #tpu.memory_space<vmem>>, vector<128x256xbf16>
    %cst_39 = arith.constant dense<0.000000e+00> : vector<8x256xf32>
    %55 = tpu.matmul %53, %54, %cst_39 {dimension_numbers = #tpu.dot_dimension_numbers<[1], [0], [0], [1], [0, 0, 1, 1], [], []>} : vector<8x128xbf16>, vector<128x256xbf16>, vector<8x256xf32> -> vector<8x256xf32>
    %c0_40 = arith.constant 0 : index
    %c0_41 = arith.constant 0 : index
    %56 = vector.load %arg16[%c0_40, %c0_41] : memref<1x256xf32, #tpu.memory_space<vmem>>, vector<1x256xf32>
    %57 = vector.broadcast %56 : vector<1x256xf32> to vector<8x256xf32>
    %58 = arith.addf %55, %57 : vector<8x256xf32>
    %cst_42 = arith.constant 0.000000e+00 : f32
    %59 = vector.broadcast %cst_42 : f32 to vector<8x256xf32>
    %60 = arith.maximumf %58, %59 : vector<8x256xf32>
    %61 = arith.truncf %60 : vector<8x256xf32> to vector<8x256xbf16>
    %c0_43 = arith.constant 0 : index
    %c0_44 = arith.constant 0 : index
    %62 = vector.load %arg17[%c0_43, %c0_44] : memref<256x128xbf16, #tpu.memory_space<vmem>>, vector<256x128xbf16>
    %cst_45 = arith.constant dense<0.000000e+00> : vector<8x128xf32>
    %63 = tpu.matmul %61, %62, %cst_45 {dimension_numbers = #tpu.dot_dimension_numbers<[1], [0], [0], [1], [0, 0, 1, 1], [], []>} : vector<8x256xbf16>, vector<256x128xbf16>, vector<8x128xf32> -> vector<8x128xf32>
    %c0_46 = arith.constant 0 : index
    %c0_47 = arith.constant 0 : index
    %64 = vector.load %arg18[%c0_46, %c0_47] : memref<1x128xf32, #tpu.memory_space<vmem>>, vector<1x128xf32>
    %65 = vector.broadcast %64 : vector<1x128xf32> to vector<8x128xf32>
    %66 = arith.addf %63, %65 : vector<8x128xf32>
    %67 = arith.truncf %52 : vector<8x128xf32> to vector<8x128xbf16>
    %c0_48 = arith.constant 0 : index
    %c0_49 = arith.constant 0 : index
    %68 = vector.load %arg19[%c0_48, %c0_49] : memref<128x256xbf16, #tpu.memory_space<vmem>>, vector<128x256xbf16>
    %cst_50 = arith.constant dense<0.000000e+00> : vector<8x256xf32>
    %69 = tpu.matmul %67, %68, %cst_50 {dimension_numbers = #tpu.dot_dimension_numbers<[1], [0], [0], [1], [0, 0, 1, 1], [], []>} : vector<8x128xbf16>, vector<128x256xbf16>, vector<8x256xf32> -> vector<8x256xf32>
    %c0_51 = arith.constant 0 : index
    %c0_52 = arith.constant 0 : index
    %70 = vector.load %arg20[%c0_51, %c0_52] : memref<1x256xf32, #tpu.memory_space<vmem>>, vector<1x256xf32>
    %71 = vector.broadcast %70 : vector<1x256xf32> to vector<8x256xf32>
    %72 = arith.addf %69, %71 : vector<8x256xf32>
    %cst_53 = arith.constant 0.000000e+00 : f32
    %73 = vector.broadcast %cst_53 : f32 to vector<8x256xf32>
    %74 = arith.maximumf %72, %73 : vector<8x256xf32>
    %75 = arith.truncf %74 : vector<8x256xf32> to vector<8x256xbf16>
    %c0_54 = arith.constant 0 : index
    %c0_55 = arith.constant 0 : index
    %76 = vector.load %arg21[%c0_54, %c0_55] : memref<256x128xbf16, #tpu.memory_space<vmem>>, vector<256x128xbf16>
    %cst_56 = arith.constant dense<0.000000e+00> : vector<8x128xf32>
    %77 = tpu.matmul %75, %76, %cst_56 {dimension_numbers = #tpu.dot_dimension_numbers<[1], [0], [0], [1], [0, 0, 1, 1], [], []>} : vector<8x256xbf16>, vector<256x128xbf16>, vector<8x128xf32> -> vector<8x128xf32>
    %c0_57 = arith.constant 0 : index
    %c0_58 = arith.constant 0 : index
    %78 = vector.load %arg22[%c0_57, %c0_58] : memref<1x128xf32, #tpu.memory_space<vmem>>, vector<1x128xf32>
    %79 = vector.broadcast %78 : vector<1x128xf32> to vector<8x128xf32>
    %80 = arith.addf %77, %79 : vector<8x128xf32>
    %cst_59 = arith.constant 0.000000e+00 : f32
    %81 = vector.broadcast %cst_59 : f32 to vector<8x128xf32>
    %82 = arith.maximumf %66, %81 : vector<8x128xf32>
    %83 = arith.truncf %82 : vector<8x128xf32> to vector<8x128xbf16>
    %c0_60 = arith.constant 0 : index
    %c0_61 = arith.constant 0 : index
    %84 = vector.load %arg23[%c0_60, %c0_61] : memref<128x128xbf16, #tpu.memory_space<vmem>>, vector<128x128xbf16>
    %cst_62 = arith.constant dense<0.000000e+00> : vector<8x128xf32>
    %85 = tpu.matmul %83, %84, %cst_62 {dimension_numbers = #tpu.dot_dimension_numbers<[1], [0], [0], [1], [0, 0, 1, 1], [], []>} : vector<8x128xbf16>, vector<128x128xbf16>, vector<8x128xf32> -> vector<8x128xf32>
    %cst_63 = arith.constant 0.000000e+00 : f32
    %86 = vector.broadcast %cst_63 : f32 to vector<8x128xf32>
    %87 = arith.maximumf %80, %86 : vector<8x128xf32>
    %88 = arith.truncf %87 : vector<8x128xf32> to vector<8x128xbf16>
    %c0_64 = arith.constant 0 : index
    %c0_65 = arith.constant 0 : index
    %89 = vector.load %arg24[%c0_64, %c0_65] : memref<128x128xbf16, #tpu.memory_space<vmem>>, vector<128x128xbf16>
    %cst_66 = arith.constant dense<0.000000e+00> : vector<8x128xf32>
    %90 = tpu.matmul %88, %89, %cst_66 {dimension_numbers = #tpu.dot_dimension_numbers<[1], [0], [0], [1], [0, 0, 1, 1], [], []>} : vector<8x128xbf16>, vector<128x128xbf16>, vector<8x128xf32> -> vector<8x128xf32>
    %91 = arith.addf %85, %90 : vector<8x128xf32>
    %c0_67 = arith.constant 0 : index
    %c0_68 = arith.constant 0 : index
    %92 = vector.load %arg25[%c0_67, %c0_68] : memref<1x128xf32, #tpu.memory_space<vmem>>, vector<1x128xf32>
    %93 = vector.broadcast %92 : vector<1x128xf32> to vector<8x128xf32>
    %94 = arith.addf %91, %93 : vector<8x128xf32>
    %c0_69 = arith.constant 0 : index
    %c0_70 = arith.constant 0 : index
    %95 = vector.load %arg26[%c0_69, %c0_70] : memref<8x128xf32, #tpu.memory_space<vmem>>, vector<8x128xf32>
    tpu.vector_store %arg26[%c0_69, %c0_70], %14 {strides = array<i32>} : memref<8x128xf32, #tpu.memory_space<vmem>>, vector<8x128xf32>,
    %c0_71 = arith.constant 0 : index
    %c0_72 = arith.constant 0 : index
    %96 = vector.load %arg27[%c0_71, %c0_72] : memref<8x128xf32, #tpu.memory_space<vmem>>, vector<8x128xf32>
    tpu.vector_store %arg27[%c0_71, %c0_72], %94 {strides = array<i32>} : memref<8x128xf32, #tpu.memory_space<vmem>>, vector<8x128xf32>,
    %c0_73 = arith.constant 0 : index
    %c0_74 = arith.constant 0 : index
    %97 = vector.load %arg28[%c0_73, %c0_74] : memref<8x128xf32, #tpu.memory_space<vmem>>, vector<8x128xf32>
    tpu.vector_store %arg28[%c0_73, %c0_74], %50 {strides = array<i32>} : memref<8x128xf32, #tpu.memory_space<vmem>>, vector<8x128xf32>,
    %c0_75 = arith.constant 0 : index
    %c0_76 = arith.constant 0 : index
    %98 = vector.load %arg29[%c0_75, %c0_76] : memref<8x128xf32, #tpu.memory_space<vmem>>, vector<8x128xf32>
    tpu.vector_store %arg29[%c0_75, %c0_76], %34 {strides = array<i32>} : memref<8x128xf32, #tpu.memory_space<vmem>>, vector<8x128xf32>,
    %c0_77 = arith.constant 0 : index
    %c0_78 = arith.constant 0 : index
    %99 = vector.load %arg30[%c0_77, %c0_78] : memref<8x256xf32, #tpu.memory_space<vmem>>, vector<8x256xf32>
    tpu.vector_store %arg30[%c0_77, %c0_78], %22 {strides = array<i32>} : memref<8x256xf32, #tpu.memory_space<vmem>>, vector<8x256xf32>,
    return
  }
  func.func @transform_0(%arg0: i32) -> (i32, i32) {
    %c0_i32 = arith.constant 0 : i32
    %c0_i32_0 = arith.constant 0 : i32
    return %arg0, %c0_i32 : i32, i32
  }
  func.func @transform_1(%arg0: i32) -> (i32, i32) {
    %c0_i32 = arith.constant 0 : i32
    %c0_i32_0 = arith.constant 0 : i32
    return %arg0, %c0_i32 : i32, i32
  }
  func.func @transform_2(%arg0: i32) -> (i32, i32) {
    %c0_i32 = arith.constant 0 : i32
    %c0_i32_0 = arith.constant 0 : i32
    return %arg0, %c0_i32 : i32, i32
  }
  func.func @transform_3(%arg0: i32) -> (i32, i32) {
    %c0_i32 = arith.constant 0 : i32
    %c0_i32_0 = arith.constant 0 : i32
    %c0_i32_1 = arith.constant 0 : i32
    return %c0_i32, %c0_i32_0 : i32, i32
  }
  func.func @transform_4(%arg0: i32) -> (i32, i32) {
    %c0_i32 = arith.constant 0 : i32
    %c0_i32_0 = arith.constant 0 : i32
    %c0_i32_1 = arith.constant 0 : i32
    return %c0_i32, %c0_i32_0 : i32, i32
  }
  func.func @transform_5(%arg0: i32) -> (i32, i32) {
    %c0_i32 = arith.constant 0 : i32
    %c0_i32_0 = arith.constant 0 : i32
    %c0_i32_1 = arith.constant 0 : i32
    return %c0_i32, %c0_i32_0 : i32, i32
  }
  func.func @transform_6(%arg0: i32) -> (i32, i32) {
    %c0_i32 = arith.constant 0 : i32
    %c0_i32_0 = arith.constant 0 : i32
    %c0_i32_1 = arith.constant 0 : i32
    return %c0_i32, %c0_i32_0 : i32, i32
  }
  func.func @transform_7(%arg0: i32) -> (i32, i32) {
    %c0_i32 = arith.constant 0 : i32
    %c0_i32_0 = arith.constant 0 : i32
    %c0_i32_1 = arith.constant 0 : i32
    return %c0_i32, %c0_i32_0 : i32, i32
  }
  func.func @transform_8(%arg0: i32) -> (i32, i32) {
    %c0_i32 = arith.constant 0 : i32
    %c0_i32_0 = arith.constant 0 : i32
    %c0_i32_1 = arith.constant 0 : i32
    return %c0_i32, %c0_i32_0 : i32, i32
  }
  func.func @transform_9(%arg0: i32) -> (i32, i32) {
    %c0_i32 = arith.constant 0 : i32
    %c0_i32_0 = arith.constant 0 : i32
    %c0_i32_1 = arith.constant 0 : i32
    return %c0_i32, %c0_i32_0 : i32, i32
  }
  func.func @transform_10(%arg0: i32) -> (i32, i32) {
    %c0_i32 = arith.constant 0 : i32
    %c0_i32_0 = arith.constant 0 : i32
    %c0_i32_1 = arith.constant 0 : i32
    return %c0_i32, %c0_i32_0 : i32, i32
  }
  func.func @transform_11(%arg0: i32) -> (i32, i32) {
    %c0_i32 = arith.constant 0 : i32
    %c0_i32_0 = arith.constant 0 : i32
    %c0_i32_1 = arith.constant 0 : i32
    return %c0_i32, %c0_i32_0 : i32, i32
  }
  func.func @transform_12(%arg0: i32) -> (i32, i32) {
    %c0_i32 = arith.constant 0 : i32
    %c0_i32_0 = arith.constant 0 : i32
    %c0_i32_1 = arith.constant 0 : i32
    return %c0_i32, %c0_i32_0 : i32, i32
  }
  func.func @transform_13(%arg0: i32) -> (i32, i32) {
    %c0_i32 = arith.constant 0 : i32
    %c0_i32_0 = arith.constant 0 : i32
    %c0_i32_1 = arith.constant 0 : i32
    return %c0_i32, %c0_i32_0 : i32, i32
  }
  func.func @transform_14(%arg0: i32) -> (i32, i32) {
    %c0_i32 = arith.constant 0 : i32
    %c0_i32_0 = arith.constant 0 : i32
    %c0_i32_1 = arith.constant 0 : i32
    return %c0_i32, %c0_i32_0 : i32, i32
  }
  func.func @transform_15(%arg0: i32) -> (i32, i32) {
    %c0_i32 = arith.constant 0 : i32
    %c0_i32_0 = arith.constant 0 : i32
    %c0_i32_1 = arith.constant 0 : i32
    return %c0_i32, %c0_i32_0 : i32, i32
  }
  func.func @transform_16(%arg0: i32) -> (i32, i32) {
    %c0_i32 = arith.constant 0 : i32
    %c0_i32_0 = arith.constant 0 : i32
    %c0_i32_1 = arith.constant 0 : i32
    return %c0_i32, %c0_i32_0 : i32, i32
  }
  func.func @transform_17(%arg0: i32) -> (i32, i32) {
    %c0_i32 = arith.constant 0 : i32
    %c0_i32_0 = arith.constant 0 : i32
    %c0_i32_1 = arith.constant 0 : i32
    return %c0_i32, %c0_i32_0 : i32, i32
  }
  func.func @transform_18(%arg0: i32) -> (i32, i32) {
    %c0_i32 = arith.constant 0 : i32
    %c0_i32_0 = arith.constant 0 : i32
    %c0_i32_1 = arith.constant 0 : i32
    return %c0_i32, %c0_i32_0 : i32, i32
  }
  func.func @transform_19(%arg0: i32) -> (i32, i32) {
    %c0_i32 = arith.constant 0 : i32
    %c0_i32_0 = arith.constant 0 : i32
    %c0_i32_1 = arith.constant 0 : i32
    return %c0_i32, %c0_i32_0 : i32, i32
  }
  func.func @transform_20(%arg0: i32) -> (i32, i32) {
    %c0_i32 = arith.constant 0 : i32
    %c0_i32_0 = arith.constant 0 : i32
    %c0_i32_1 = arith.constant 0 : i32
    return %c0_i32, %c0_i32_0 : i32, i32
  }
  func.func @transform_21(%arg0: i32) -> (i32, i32) {
    %c0_i32 = arith.constant 0 : i32
    %c0_i32_0 = arith.constant 0 : i32
    %c0_i32_1 = arith.constant 0 : i32
    return %c0_i32, %c0_i32_0 : i32, i32
  }
  func.func @transform_22(%arg0: i32) -> (i32, i32) {
    %c0_i32 = arith.constant 0 : i32
    %c0_i32_0 = arith.constant 0 : i32
    %c0_i32_1 = arith.constant 0 : i32
    return %c0_i32, %c0_i32_0 : i32, i32
  }
  func.func @transform_23(%arg0: i32) -> (i32, i32) {
    %c0_i32 = arith.constant 0 : i32
    %c0_i32_0 = arith.constant 0 : i32
    %c0_i32_1 = arith.constant 0 : i32
    return %c0_i32, %c0_i32_0 : i32, i32
  }
  func.func @transform_24(%arg0: i32) -> (i32, i32) {
    %c0_i32 = arith.constant 0 : i32
    %c0_i32_0 = arith.constant 0 : i32
    %c0_i32_1 = arith.constant 0 : i32
    return %c0_i32, %c0_i32_0 : i32, i32
  }
  func.func @transform_25(%arg0: i32) -> (i32, i32) {
    %c0_i32 = arith.constant 0 : i32
    %c0_i32_0 = arith.constant 0 : i32
    return %arg0, %c0_i32 : i32, i32
  }
  func.func @transform_26(%arg0: i32) -> (i32, i32) {
    %c0_i32 = arith.constant 0 : i32
    %c0_i32_0 = arith.constant 0 : i32
    return %arg0, %c0_i32 : i32, i32
  }
  func.func @transform_27(%arg0: i32) -> (i32, i32) {
    %c0_i32 = arith.constant 0 : i32
    %c0_i32_0 = arith.constant 0 : i32
    return %arg0, %c0_i32 : i32, i32
  }
  func.func @transform_28(%arg0: i32) -> (i32, i32) {
    %c0_i32 = arith.constant 0 : i32
    %c0_i32_0 = arith.constant 0 : i32
    return %arg0, %c0_i32 : i32, i32
  }
  func.func @transform_29(%arg0: i32) -> (i32, i32) {
    %c0_i32 = arith.constant 0 : i32
    %c0_i32_0 = arith.constant 0 : i32
    return %arg0, %c0_i32 : i32, i32
  }
}

</mosaic_0001>

<llo_original>
// kernel: mlp_oneway_att_confuse_forward.1
$region0: #{mlp_oneway_att_confuse_forward.1}
  #allocation0 [shape = 'u32[]', space=smem, size = 0x4, offset = 0x4, fixed_abs, tag = 'smem constant byte address 0x4 - core index']
  #allocation1 [shape = 'u32[144,128]{1,0:T(1,128)}', space=vmem, size = 0x12000, scoped, tag = 'internal scratch']
  %s0 = inlined_call_operand.smem [shape: u32[30], index: -1, kind: input, shape index: {}]
  %s1 = sld [smem:[%s0]]
  %s2 = scalar_lea.smem %s0, 1
  %s3 = sld [smem:[%s2]]
  %s4 = scalar_lea.smem %s0, 2
  %s5 = sld [smem:[%s4]]
  %s6 = scalar_lea.smem %s0, 3
  %s7 = sld [smem:[%s6]]
  %s8 = scalar_lea.smem %s0, 4
  %s9 = sld [smem:[%s8]]
  %s10 = scalar_lea.smem %s0, 5
  %s11 = sld [smem:[%s10]]
  %s12 = scalar_lea.smem %s0, 6
  %s13 = sld [smem:[%s12]]
  %s14 = scalar_lea.smem %s0, 7
  %s15 = sld [smem:[%s14]]
  %s16 = scalar_lea.smem %s0, 8
  %s17 = sld [smem:[%s16]]
  %s18 = scalar_lea.smem %s0, 9
  %s19 = sld [smem:[%s18]]
  %s20 = scalar_lea.smem %s0, 10
  %s21 = sld [smem:[%s20]]
  %s22 = scalar_lea.smem %s0, 11
  %s23 = sld [smem:[%s22]]
  %s24 = scalar_lea.smem %s0, 12
  %s25 = sld [smem:[%s24]]
  %s26 = scalar_lea.smem %s0, 13
  %s27 = sld [smem:[%s26]]
  %s28 = scalar_lea.smem %s0, 14
  %s29 = sld [smem:[%s28]]
  %s30 = scalar_lea.smem %s0, 15
  %s31 = sld [smem:[%s30]]
  %s32 = scalar_lea.smem %s0, 16
  %s33 = sld [smem:[%s32]]
  %s34 = scalar_lea.smem %s0, 17
  %s35 = sld [smem:[%s34]]
  %s36 = scalar_lea.smem %s0, 18
  %s37 = sld [smem:[%s36]]
  %s38 = scalar_lea.smem %s0, 19
  %s39 = sld [smem:[%s38]]
  %s40 = scalar_lea.smem %s0, 20
  %s41 = sld [smem:[%s40]]
  %s42 = scalar_lea.smem %s0, 21
  %s43 = sld [smem:[%s42]]
  %s44 = scalar_lea.smem %s0, 22
  %s45 = sld [smem:[%s44]]
  %s46 = scalar_lea.smem %s0, 23
  %s47 = sld [smem:[%s46]]
  %s48 = scalar_lea.smem %s0, 24
  %s49 = sld [smem:[%s48]]
  %s50 = scalar_lea.smem %s0, 25
  %s51 = sld [smem:[%s50]]
  %s52 = scalar_lea.smem %s0, 26
  %s53 = sld [smem:[%s52]]
  %s54 = scalar_lea.smem %s0, 27
  %s55 = sld [smem:[%s54]]
  %s56 = scalar_lea.smem %s0, 28
  %s57 = sld [smem:[%s56]]
  %s58 = scalar_lea.smem %s0, 29
  %s59 = sld [smem:[%s58]]
  %60 = xla_tuple %s51, %s53, %s55, %s57, %s59
  %s61 = sld [smem:[#allocation0]]
  $region202: #{mlp_oneway_att_confuse_forward.1} parent=0
    _
  %s63 = ssub.s32 1, %s61
  %s64 = scalar_select 0, %s63, %s61
  $region1: #{mlp_oneway_att_confuse_forward.1} parent=0
    #allocation2 [shape = 'u8[131072]{0}', space=vmem, size = 0x20000, scoped, tag = 'input window, operand 3, single buffered']
    #allocation3 [shape = 's32[1]{0}', space=sflag, size = 0x4, scoped, tag = 'scoped memory for mlp_oneway_att_confuse_forward.1']
    #allocation4 [shape = 'u8[65536]{0}', space=vmem, size = 0x10000, scoped, tag = 'input window, operand 5, single buffered']
    #allocation5 [shape = 's32[1]{0}', space=sflag, size = 0x4, scoped, tag = 'scoped memory for mlp_oneway_att_confuse_forward.1']
    #allocation6 [shape = 'u8[512]{0}', space=vmem, size = 0x400, scoped, tag = 'input window, operand 6, single buffered']
    #allocation7 [shape = 'u8[65536]{0}', space=vmem, size = 0x10000, scoped, tag = 'input window, operand 7, single buffered']
    #allocation8 [shape = 's32[1]{0}', space=sflag, size = 0x4, scoped, tag = 'scoped memory for mlp_oneway_att_confuse_forward.1']
    #allocation9 [shape = 'u8[32768]{0}', space=vmem, size = 0x8000, scoped, tag = 'input window, operand 9, single buffered']
    #allocation10 [shape = 'u8[65536]{0}', space=vmem, size = 0x10000, scoped, tag = 'input window, operand 10, single buffered']
    #allocation11 [shape = 's32[1]{0}', space=sflag, size = 0x4, scoped, tag = 'scoped memory for mlp_oneway_att_confuse_forward.1']
    #allocation12 [shape = 'u8[512]{0}', space=vmem, size = 0x400, scoped, tag = 'input window, operand 11, single buffered']
    #allocation13 [shape = 'u8[512]{0}', space=vmem, size = 0x400, scoped, tag = 'input window, operand 13, single buffered']
    #allocation14 [shape = 's32[1]{0}', space=sflag, size = 0x4, scoped, tag = 'scoped memory for mlp_oneway_att_confuse_forward.1']
    #allocation15 [shape = 'u8[65536]{0}', space=vmem, size = 0x10000, scoped, tag = 'input window, operand 14, single buffered']
    #allocation16 [shape = 'u8[65536]{0}', space=vmem, size = 0x10000, scoped, tag = 'input window, operand 16, single buffered']
    #allocation17 [shape = 's32[1]{0}', space=sflag, size = 0x4, scoped, tag = 'scoped memory for mlp_oneway_att_confuse_forward.1']
    #allocation18 [shape = 'u8[65536]{0}', space=vmem, size = 0x10000, scoped, tag = 'input window, operand 18, single buffered']
    #allocation19 [shape = 'u8[65536]{0}', space=vmem, size = 0x10000, scoped, tag = 'input window, operand 20, single buffered']
    #allocation20 [shape = 's32[1]{0}', space=sflag, size = 0x4, scoped, tag = 'scoped memory for mlp_oneway_att_confuse_forward.1']
    #allocation21 [shape = 'u8[32768]{0}', space=vmem, size = 0x8000, scoped, tag = 'input window, operand 22, single buffered']
    #allocation22 [shape = 'u8[32768]{0}', space=vmem, size = 0x8000, scoped, tag = 'input window, operand 23, single buffered']
    #allocation23 [shape = 's32[1]{0}', space=sflag, size = 0x4, scoped, tag = 'scoped memory for mlp_oneway_att_confuse_forward.1']
    #allocation24 [shape = 'u8[512]{0}', space=vmem, size = 0x400, scoped, tag = 'input window, operand 24, single buffered']
    %65 = vsyncpa [#allocation3], 0
    %66 = vsyncpa [#allocation5], 0
    %67 = vsyncpa [#allocation8], 0
    %68 = vsyncpa [#allocation11], 0
    %69 = vsyncpa [#allocation14], 0
    %70 = vsyncpa [#allocation17], 0
    %71 = vsyncpa [#allocation20], 0
    %72 = vsyncpa [#allocation23], 0
    // Predicated region
    $region2: #{mlp_oneway_att_confuse_forward.1} parent=1 // pred_check
      _
    $region3: #{mlp_oneway_att_confuse_forward.1} parent=1 // pred_check_branch
      %74 = sbr.rel (0) target = $region5
    $region4: #{mlp_oneway_att_confuse_forward.1} parent=1 // pred_region
      _
    $region5: #{mlp_oneway_att_confuse_forward.1} parent=1 // pred_fallthru
      _
    // Predicated region
    $region6: #{mlp_oneway_att_confuse_forward.1} parent=1 // pred_check
      _
    $region7: #{mlp_oneway_att_confuse_forward.1} parent=1 // pred_check_branch
      %76 = sbr.rel (0) target = $region9
    $region8: #{mlp_oneway_att_confuse_forward.1} parent=1 // pred_region
      _
    $region9: #{mlp_oneway_att_confuse_forward.1} parent=1 // pred_fallthru
      _
    // Predicated region
    $region10: #{mlp_oneway_att_confuse_forward.1} parent=1 // pred_check
      _
    $region11: #{mlp_oneway_att_confuse_forward.1} parent=1 // pred_check_branch
      %78 = sbr.rel (0) target = $region13
    $region12: #{mlp_oneway_att_confuse_forward.1} parent=1 // pred_region
      _
    $region13: #{mlp_oneway_att_confuse_forward.1} parent=1 // pred_fallthru
      _
    // Predicated region
    $region14: #{mlp_oneway_att_confuse_forward.1} parent=1 // pred_check
      _
    $region15: #{mlp_oneway_att_confuse_forward.1} parent=1 // pred_check_branch
      %80 = sbr.rel (0) target = $region17
    $region16: #{mlp_oneway_att_confuse_forward.1} parent=1 // pred_region
      %s82 = ssub.s32 4096, 4096
      %83 = vsyncadd [#allocation3], %s82
      %s84 = sshll.u32 [#allocation2], 4
      %s85 = int_to_ptr.vmem [resolvable:$true] %s84
      %90 = dma.hbm_to_vmem [thread:$0]  %s7, 4096, %s85, [#allocation3], 128, 128, 8
    $region17: #{mlp_oneway_att_confuse_forward.1} parent=1 // pred_fallthru
      _
    // Predicated region
    $region18: #{mlp_oneway_att_confuse_forward.1} parent=1 // pred_check
      _
    $region19: #{mlp_oneway_att_confuse_forward.1} parent=1 // pred_check_branch
      %92 = sbr.rel (0) target = $region21
    $region20: #{mlp_oneway_att_confuse_forward.1} parent=1 // pred_region
      _
    $region21: #{mlp_oneway_att_confuse_forward.1} parent=1 // pred_fallthru
      _
    // Predicated region
    $region22: #{mlp_oneway_att_confuse_forward.1} parent=1 // pred_check
      _
    $region23: #{mlp_oneway_att_confuse_forward.1} parent=1 // pred_check_branch
      %94 = sbr.rel (0) target = $region25
    $region24: #{mlp_oneway_att_confuse_forward.1} parent=1 // pred_region
      %s96 = ssub.s32 2048, 2048
      %97 = vsyncadd [#allocation5], %s96
      %s98 = sshll.u32 [#allocation4], 4
      %s99 = int_to_ptr.vmem [resolvable:$true] %s98
      %104 = dma.hbm_to_vmem [thread:$0]  %s11, 2048, %s99, [#allocation5], 64, 64, 4
    $region25: #{mlp_oneway_att_confuse_forward.1} parent=1 // pred_fallthru
      _
    // Predicated region
    $region26: #{mlp_oneway_att_confuse_forward.1} parent=1 // pred_check
      _
    $region27: #{mlp_oneway_att_confuse_forward.1} parent=1 // pred_check_branch
      %106 = sbr.rel (0) target = $region29
    $region28: #{mlp_oneway_att_confuse_forward.1} parent=1 // pred_region
      %s108 = ssub.s32 16, 16
      %109 = vsyncadd [#allocation5], %s108
      %s111 = sshll.u32 [#allocation6], 4
      %s112 = int_to_ptr.vmem [resolvable:$true] %s111
      %114 = dma.hbm_to_vmem [thread:$0]  %s13, 16, %s112, [#allocation5]
    $region29: #{mlp_oneway_att_confuse_forward.1} parent=1 // pred_fallthru
      _
    // Predicated region
    $region30: #{mlp_oneway_att_confuse_forward.1} parent=1 // pred_check
      _
    $region31: #{mlp_oneway_att_confuse_forward.1} parent=1 // pred_check_branch
      %116 = sbr.rel (0) target = $region33
    $region32: #{mlp_oneway_att_confuse_forward.1} parent=1 // pred_region
      %s118 = ssub.s32 2048, 2048
      %119 = vsyncadd [#allocation8], %s118
      %s120 = sshll.u32 [#allocation7], 4
      %s121 = int_to_ptr.vmem [resolvable:$true] %s120
      %126 = dma.hbm_to_vmem [thread:$0]  %s15, 2048, %s121, [#allocation8], 128, 128, 8
    $region33: #{mlp_oneway_att_confuse_forward.1} parent=1 // pred_fallthru
      _
    // Predicated region
    $region34: #{mlp_oneway_att_confuse_forward.1} parent=1 // pred_check
      _
    $region35: #{mlp_oneway_att_confuse_forward.1} parent=1 // pred_check_branch
      %128 = sbr.rel (0) target = $region37
    $region36: #{mlp_oneway_att_confuse_forward.1} parent=1 // pred_region
      _
    $region37: #{mlp_oneway_att_confuse_forward.1} parent=1 // pred_fallthru
      _
    // Predicated region
    $region38: #{mlp_oneway_att_confuse_forward.1} parent=1 // pred_check
      _
    $region39: #{mlp_oneway_att_confuse_forward.1} parent=1 // pred_check_branch
      %130 = sbr.rel (0) target = $region41
    $region40: #{mlp_oneway_att_confuse_forward.1} parent=1 // pred_region
      %s132 = ssub.s32 1024, 1024
      %133 = vsyncadd [#allocation8], %s132
      %s134 = sshll.u32 [#allocation9], 4
      %s135 = int_to_ptr.vmem [resolvable:$true] %s134
      %140 = dma.hbm_to_vmem [thread:$0]  %s19, 1024, %s135, [#allocation8], 64, 64, 4
    $region41: #{mlp_oneway_att_confuse_forward.1} parent=1 // pred_fallthru
      _
    // Predicated region
    $region42: #{mlp_oneway_att_confuse_forward.1} parent=1 // pred_check
      _
    $region43: #{mlp_oneway_att_confuse_forward.1} parent=1 // pred_check_branch
      %142 = sbr.rel (0) target = $region45
    $region44: #{mlp_oneway_att_confuse_forward.1} parent=1 // pred_region
      %s144 = ssub.s32 2048, 2048
      %145 = vsyncadd [#allocation11], %s144
      %s146 = sshll.u32 [#allocation10], 4
      %s147 = int_to_ptr.vmem [resolvable:$true] %s146
      %152 = dma.hbm_to_vmem [thread:$0]  %s21, 2048, %s147, [#allocation11], 64, 64, 4
    $region45: #{mlp_oneway_att_confuse_forward.1} parent=1 // pred_fallthru
      _
    // Predicated region
    $region46: #{mlp_oneway_att_confuse_forward.1} parent=1 // pred_check
      _
    $region47: #{mlp_oneway_att_confuse_forward.1} parent=1 // pred_check_branch
      %154 = sbr.rel (0) target = $region49
    $region48: #{mlp_oneway_att_confuse_forward.1} parent=1 // pred_region
      %s156 = ssub.s32 16, 16
      %157 = vsyncadd [#allocation11], %s156
      %s159 = sshll.u32 [#allocation12], 4
      %s160 = int_to_ptr.vmem [resolvable:$true] %s159
      %162 = dma.hbm_to_vmem [thread:$0]  %s23, 16, %s160, [#allocation11]
    $region49: #{mlp_oneway_att_confuse_forward.1} parent=1 // pred_fallthru
      _
    // Predicated region
    $region50: #{mlp_oneway_att_confuse_forward.1} parent=1 // pred_check
      _
    $region51: #{mlp_oneway_att_confuse_forward.1} parent=1 // pred_check_branch
      %164 = sbr.rel (0) target = $region53
    $region52: #{mlp_oneway_att_confuse_forward.1} parent=1 // pred_region
      _
    $region53: #{mlp_oneway_att_confuse_forward.1} parent=1 // pred_fallthru
      _
    // Predicated region
    $region54: #{mlp_oneway_att_confuse_forward.1} parent=1 // pred_check
      _
    $region55: #{mlp_oneway_att_confuse_forward.1} parent=1 // pred_check_branch
      %166 = sbr.rel (0) target = $region57
    $region56: #{mlp_oneway_att_confuse_forward.1} parent=1 // pred_region
      %s168 = ssub.s32 16, 16
      %169 = vsyncadd [#allocation14], %s168
      %s171 = sshll.u32 [#allocation13], 4
      %s172 = int_to_ptr.vmem [resolvable:$true] %s171
      %174 = dma.hbm_to_vmem [thread:$0]  %s27, 16, %s172, [#allocation14]
    $region57: #{mlp_oneway_att_confuse_forward.1} parent=1 // pred_fallthru
      _
    // Predicated region
    $region58: #{mlp_oneway_att_confuse_forward.1} parent=1 // pred_check
      _
    $region59: #{mlp_oneway_att_confuse_forward.1} parent=1 // pred_check_branch
      %176 = sbr.rel (0) target = $region61
    $region60: #{mlp_oneway_att_confuse_forward.1} parent=1 // pred_region
      %s178 = ssub.s32 2048, 2048
      %179 = vsyncadd [#allocation14], %s178
      %s180 = sshll.u32 [#allocation15], 4
      %s181 = int_to_ptr.vmem [resolvable:$true] %s180
      %186 = dma.hbm_to_vmem [thread:$0]  %s29, 2048, %s181, [#allocation14], 128, 128, 8
    $region61: #{mlp_oneway_att_confuse_forward.1} parent=1 // pred_fallthru
      _
    // Predicated region
    $region62: #{mlp_oneway_att_confuse_forward.1} parent=1 // pred_check
      _
    $region63: #{mlp_oneway_att_confuse_forward.1} parent=1 // pred_check_branch
      %188 = sbr.rel (0) target = $region65
    $region64: #{mlp_oneway_att_confuse_forward.1} parent=1 // pred_region
      _
    $region65: #{mlp_oneway_att_confuse_forward.1} parent=1 // pred_fallthru
      _
    // Predicated region
    $region66: #{mlp_oneway_att_confuse_forward.1} parent=1 // pred_check
      _
    $region67: #{mlp_oneway_att_confuse_forward.1} parent=1 // pred_check_branch
      %190 = sbr.rel (0) target = $region69
    $region68: #{mlp_oneway_att_confuse_forward.1} parent=1 // pred_region
      %s192 = ssub.s32 2048, 2048
      %193 = vsyncadd [#allocation17], %s192
      %s194 = sshll.u32 [#allocation16], 4
      %s195 = int_to_ptr.vmem [resolvable:$true] %s194
      %200 = dma.hbm_to_vmem [thread:$0]  %s33, 2048, %s195, [#allocation17], 64, 64, 4
    $region69: #{mlp_oneway_att_confuse_forward.1} parent=1 // pred_fallthru
      _
    // Predicated region
    $region70: #{mlp_oneway_att_confuse_forward.1} parent=1 // pred_check
      _
    $region71: #{mlp_oneway_att_confuse_forward.1} parent=1 // pred_check_branch
      %202 = sbr.rel (0) target = $region73
    $region72: #{mlp_oneway_att_confuse_forward.1} parent=1 // pred_region
      _
    $region73: #{mlp_oneway_att_confuse_forward.1} parent=1 // pred_fallthru
      _
    // Predicated region
    $region74: #{mlp_oneway_att_confuse_forward.1} parent=1 // pred_check
      _
    $region75: #{mlp_oneway_att_confuse_forward.1} parent=1 // pred_check_branch
      %204 = sbr.rel (0) target = $region77
    $region76: #{mlp_oneway_att_confuse_forward.1} parent=1 // pred_region
      %s206 = ssub.s32 2048, 2048
      %207 = vsyncadd [#allocation17], %s206
      %s208 = sshll.u32 [#allocation18], 4
      %s209 = int_to_ptr.vmem [resolvable:$true] %s208
      %214 = dma.hbm_to_vmem [thread:$0]  %s37, 2048, %s209, [#allocation17], 128, 128, 8
    $region77: #{mlp_oneway_att_confuse_forward.1} parent=1 // pred_fallthru
      _
    // Predicated region
    $region78: #{mlp_oneway_att_confuse_forward.1} parent=1 // pred_check
      _
    $region79: #{mlp_oneway_att_confuse_forward.1} parent=1 // pred_check_branch
      %216 = sbr.rel (0) target = $region81
    $region80: #{mlp_oneway_att_confuse_forward.1} parent=1 // pred_region
      _
    $region81: #{mlp_oneway_att_confuse_forward.1} parent=1 // pred_fallthru
      _
    // Predicated region
    $region82: #{mlp_oneway_att_confuse_forward.1} parent=1 // pred_check
      _
    $region83: #{mlp_oneway_att_confuse_forward.1} parent=1 // pred_check_branch
      %218 = sbr.rel (0) target = $region85
    $region84: #{mlp_oneway_att_confuse_forward.1} parent=1 // pred_region
      %s220 = ssub.s32 2048, 2048
      %221 = vsyncadd [#allocation20], %s220
      %s222 = sshll.u32 [#allocation19], 4
      %s223 = int_to_ptr.vmem [resolvable:$true] %s222
      %228 = dma.hbm_to_vmem [thread:$0]  %s41, 2048, %s223, [#allocation20], 64, 64, 4
    $region85: #{mlp_oneway_att_confuse_forward.1} parent=1 // pred_fallthru
      _
    // Predicated region
    $region86: #{mlp_oneway_att_confuse_forward.1} parent=1 // pred_check
      _
    $region87: #{mlp_oneway_att_confuse_forward.1} parent=1 // pred_check_branch
      %230 = sbr.rel (0) target = $region89
    $region88: #{mlp_oneway_att_confuse_forward.1} parent=1 // pred_region
      _
    $region89: #{mlp_oneway_att_confuse_forward.1} parent=1 // pred_fallthru
      _
    // Predicated region
    $region90: #{mlp_oneway_att_confuse_forward.1} parent=1 // pred_check
      _
    $region91: #{mlp_oneway_att_confuse_forward.1} parent=1 // pred_check_branch
      %232 = sbr.rel (0) target = $region93
    $region92: #{mlp_oneway_att_confuse_forward.1} parent=1 // pred_region
      %s234 = ssub.s32 1024, 1024
      %235 = vsyncadd [#allocation20], %s234
      %s236 = sshll.u32 [#allocation21], 4
      %s237 = int_to_ptr.vmem [resolvable:$true] %s236
      %242 = dma.hbm_to_vmem [thread:$0]  %s45, 1024, %s237, [#allocation20], 64, 64, 4
    $region93: #{mlp_oneway_att_confuse_forward.1} parent=1 // pred_fallthru
      _
    // Predicated region
    $region94: #{mlp_oneway_att_confuse_forward.1} parent=1 // pred_check
      _
    $region95: #{mlp_oneway_att_confuse_forward.1} parent=1 // pred_check_branch
      %244 = sbr.rel (0) target = $region97
    $region96: #{mlp_oneway_att_confuse_forward.1} parent=1 // pred_region
      %s246 = ssub.s32 1024, 1024
      %247 = vsyncadd [#allocation23], %s246
      %s248 = sshll.u32 [#allocation22], 4
      %s249 = int_to_ptr.vmem [resolvable:$true] %s248
      %254 = dma.hbm_to_vmem [thread:$0]  %s47, 1024, %s249, [#allocation23], 64, 64, 4
    $region97: #{mlp_oneway_att_confuse_forward.1} parent=1 // pred_fallthru
      _
    // Predicated region
    $region98: #{mlp_oneway_att_confuse_forward.1} parent=1 // pred_check
      _
    $region99: #{mlp_oneway_att_confuse_forward.1} parent=1 // pred_check_branch
      %256 = sbr.rel (0) target = $region101
    $region100: #{mlp_oneway_att_confuse_forward.1} parent=1 // pred_region
      %s258 = ssub.s32 16, 16
      %259 = vsyncadd [#allocation23], %s258
      %s261 = sshll.u32 [#allocation24], 4
      %s262 = int_to_ptr.vmem [resolvable:$true] %s261
      %264 = dma.hbm_to_vmem [thread:$0]  %s49, 16, %s262, [#allocation23]
    $region101: #{mlp_oneway_att_confuse_forward.1} parent=1 // pred_fallthru
      _
    // Predicated region
    $region102: #{mlp_oneway_att_confuse_forward.1} parent=1 // pred_check
      _
    $region103: #{mlp_oneway_att_confuse_forward.1} parent=1 // pred_check_branch
      %266 = sbr.rel (0) target = $region105
    $region104: #{mlp_oneway_att_confuse_forward.1} parent=1 // pred_region
      %267 = dma.done [#allocation3], 4096
    $region105: #{mlp_oneway_att_confuse_forward.1} parent=1 // pred_fallthru
      _
    // Predicated region
    $region106: #{mlp_oneway_att_confuse_forward.1} parent=1 // pred_check
      _
    $region107: #{mlp_oneway_att_confuse_forward.1} parent=1 // pred_check_branch
      %269 = sbr.rel (0) target = $region109
    $region108: #{mlp_oneway_att_confuse_forward.1} parent=1 // pred_region
      %270 = dma.done [#allocation5], 2048
    $region109: #{mlp_oneway_att_confuse_forward.1} parent=1 // pred_fallthru
      _
    // Predicated region
    $region110: #{mlp_oneway_att_confuse_forward.1} parent=1 // pred_check
      _
    $region111: #{mlp_oneway_att_confuse_forward.1} parent=1 // pred_check_branch
      %272 = sbr.rel (0) target = $region113
    $region112: #{mlp_oneway_att_confuse_forward.1} parent=1 // pred_region
      %273 = dma.done [#allocation5], 16
    $region113: #{mlp_oneway_att_confuse_forward.1} parent=1 // pred_fallthru
      _
    // Predicated region
    $region114: #{mlp_oneway_att_confuse_forward.1} parent=1 // pred_check
      _
    $region115: #{mlp_oneway_att_confuse_forward.1} parent=1 // pred_check_branch
      %275 = sbr.rel (0) target = $region117
    $region116: #{mlp_oneway_att_confuse_forward.1} parent=1 // pred_region
      %276 = dma.done [#allocation8], 2048
    $region117: #{mlp_oneway_att_confuse_forward.1} parent=1 // pred_fallthru
      _
    // Predicated region
    $region118: #{mlp_oneway_att_confuse_forward.1} parent=1 // pred_check
      _
    $region119: #{mlp_oneway_att_confuse_forward.1} parent=1 // pred_check_branch
      %278 = sbr.rel (0) target = $region121
    $region120: #{mlp_oneway_att_confuse_forward.1} parent=1 // pred_region
      %279 = dma.done [#allocation8], 1024
    $region121: #{mlp_oneway_att_confuse_forward.1} parent=1 // pred_fallthru
      _
    // Predicated region
    $region122: #{mlp_oneway_att_confuse_forward.1} parent=1 // pred_check
      _
    $region123: #{mlp_oneway_att_confuse_forward.1} parent=1 // pred_check_branch
      %281 = sbr.rel (0) target = $region125
    $region124: #{mlp_oneway_att_confuse_forward.1} parent=1 // pred_region
      %282 = dma.done [#allocation11], 2048
    $region125: #{mlp_oneway_att_confuse_forward.1} parent=1 // pred_fallthru
      _
    // Predicated region
    $region126: #{mlp_oneway_att_confuse_forward.1} parent=1 // pred_check
      _
    $region127: #{mlp_oneway_att_confuse_forward.1} parent=1 // pred_check_branch
      %284 = sbr.rel (0) target = $region129
    $region128: #{mlp_oneway_att_confuse_forward.1} parent=1 // pred_region
      %285 = dma.done [#allocation11], 16
    $region129: #{mlp_oneway_att_confuse_forward.1} parent=1 // pred_fallthru
      _
    // Predicated region
    $region130: #{mlp_oneway_att_confuse_forward.1} parent=1 // pred_check
      _
    $region131: #{mlp_oneway_att_confuse_forward.1} parent=1 // pred_check_branch
      %287 = sbr.rel (0) target = $region133
    $region132: #{mlp_oneway_att_confuse_forward.1} parent=1 // pred_region
      %288 = dma.done [#allocation14], 16
    $region133: #{mlp_oneway_att_confuse_forward.1} parent=1 // pred_fallthru
      _
    // Predicated region
    $region134: #{mlp_oneway_att_confuse_forward.1} parent=1 // pred_check
      _
    $region135: #{mlp_oneway_att_confuse_forward.1} parent=1 // pred_check_branch
      %290 = sbr.rel (0) target = $region137
    $region136: #{mlp_oneway_att_confuse_forward.1} parent=1 // pred_region
      %291 = dma.done [#allocation14], 2048
    $region137: #{mlp_oneway_att_confuse_forward.1} parent=1 // pred_fallthru
      _
    // Predicated region
    $region138: #{mlp_oneway_att_confuse_forward.1} parent=1 // pred_check
      _
    $region139: #{mlp_oneway_att_confuse_forward.1} parent=1 // pred_check_branch
      %293 = sbr.rel (0) target = $region141
    $region140: #{mlp_oneway_att_confuse_forward.1} parent=1 // pred_region
      %294 = dma.done [#allocation17], 2048
    $region141: #{mlp_oneway_att_confuse_forward.1} parent=1 // pred_fallthru
      _
    // Predicated region
    $region142: #{mlp_oneway_att_confuse_forward.1} parent=1 // pred_check
      _
    $region143: #{mlp_oneway_att_confuse_forward.1} parent=1 // pred_check_branch
      %296 = sbr.rel (0) target = $region145
    $region144: #{mlp_oneway_att_confuse_forward.1} parent=1 // pred_region
      %297 = dma.done [#allocation17], 2048
    $region145: #{mlp_oneway_att_confuse_forward.1} parent=1 // pred_fallthru
      _
    // Predicated region
    $region146: #{mlp_oneway_att_confuse_forward.1} parent=1 // pred_check
      _
    $region147: #{mlp_oneway_att_confuse_forward.1} parent=1 // pred_check_branch
      %299 = sbr.rel (0) target = $region149
    $region148: #{mlp_oneway_att_confuse_forward.1} parent=1 // pred_region
      %300 = dma.done [#allocation20], 2048
    $region149: #{mlp_oneway_att_confuse_forward.1} parent=1 // pred_fallthru
      _
    // Predicated region
    $region150: #{mlp_oneway_att_confuse_forward.1} parent=1 // pred_check
      _
    $region151: #{mlp_oneway_att_confuse_forward.1} parent=1 // pred_check_branch
      %302 = sbr.rel (0) target = $region153
    $region152: #{mlp_oneway_att_confuse_forward.1} parent=1 // pred_region
      %303 = dma.done [#allocation20], 1024
    $region153: #{mlp_oneway_att_confuse_forward.1} parent=1 // pred_fallthru
      _
    // Predicated region
    $region154: #{mlp_oneway_att_confuse_forward.1} parent=1 // pred_check
      _
    $region155: #{mlp_oneway_att_confuse_forward.1} parent=1 // pred_check_branch
      %305 = sbr.rel (0) target = $region157
    $region156: #{mlp_oneway_att_confuse_forward.1} parent=1 // pred_region
      %306 = dma.done [#allocation23], 1024
    $region157: #{mlp_oneway_att_confuse_forward.1} parent=1 // pred_fallthru
      _
    // Predicated region
    $region158: #{mlp_oneway_att_confuse_forward.1} parent=1 // pred_check
      _
    $region159: #{mlp_oneway_att_confuse_forward.1} parent=1 // pred_check_branch
      %308 = sbr.rel (0) target = $region161
    $region160: #{mlp_oneway_att_confuse_forward.1} parent=1 // pred_region
      %309 = dma.done [#allocation23], 16
    $region161: #{mlp_oneway_att_confuse_forward.1} parent=1 // pred_fallthru
      _
    %v311 = vld [vmem:[%s1] sm:$0xff]
    %v312 = vld [vmem:[%s1 + $0x8] sm:$0xff]
    %v313 = vpack.c.bf16 %v311, %v311
    %v314 = vpack.c.bf16 %v312, %v312
    %v315 = vld [vmem:[#allocation2] sm:$0xff]
    %v316 = vld [vmem:[#allocation2 + $0x8] sm:$0xff]
    %v317 = vld [vmem:[#allocation2 + $0x10] sm:$0xff]
    %v318 = vld [vmem:[#allocation2 + $0x18] sm:$0xff]
    %v319 = vld [vmem:[#allocation2 + $0x20] sm:$0xff]
    %v320 = vld [vmem:[#allocation2 + $0x28] sm:$0xff]
    %v321 = vld [vmem:[#allocation2 + $0x30] sm:$0xff]
    %v322 = vld [vmem:[#allocation2 + $0x38] sm:$0xff]
    %v323 = vld [vmem:[#allocation2 + $0x40] sm:$0xff]
    %v324 = vld [vmem:[#allocation2 + $0x48] sm:$0xff]
    %v325 = vld [vmem:[#allocation2 + $0x50] sm:$0xff]
    %v326 = vld [vmem:[#allocation2 + $0x58] sm:$0xff]
    %v327 = vld [vmem:[#allocation2 + $0x60] sm:$0xff]
    %v328 = vld [vmem:[#allocation2 + $0x68] sm:$0xff]
    %v329 = vld [vmem:[#allocation2 + $0x70] sm:$0xff]
    %v330 = vld [vmem:[#allocation2 + $0x78] sm:$0xff]
    %v331 = vld [vmem:[#allocation2 + $0x80] sm:$0xff]
    %v332 = vld [vmem:[#allocation2 + $0x88] sm:$0xff]
    %v333 = vld [vmem:[#allocation2 + $0x90] sm:$0xff]
    %v334 = vld [vmem:[#allocation2 + $0x98] sm:$0xff]
    %v335 = vld [vmem:[#allocation2 + $0xa0] sm:$0xff]
    %v336 = vld [vmem:[#allocation2 + $0xa8] sm:$0xff]
    %v337 = vld [vmem:[#allocation2 + $0xb0] sm:$0xff]
    %v338 = vld [vmem:[#allocation2 + $0xb8] sm:$0xff]
    %v339 = vld [vmem:[#allocation2 + $0xc0] sm:$0xff]
    %v340 = vld [vmem:[#allocation2 + $0xc8] sm:$0xff]
    %v341 = vld [vmem:[#allocation2 + $0xd0] sm:$0xff]
    %v342 = vld [vmem:[#allocation2 + $0xd8] sm:$0xff]
    %v343 = vld [vmem:[#allocation2 + $0xe0] sm:$0xff]
    %v344 = vld [vmem:[#allocation2 + $0xe8] sm:$0xff]
    %v345 = vld [vmem:[#allocation2 + $0xf0] sm:$0xff]
    %v346 = vld [vmem:[#allocation2 + $0xf8] sm:$0xff]
    %v347 = vld [vmem:[%s9] sm:$0x3]
    %v349 = vlaneseq
    %v350 = vshrl.u32 %v349, 7
    %v351 = vsub.s32 0, %v350
    %v352 = vrot.slane %v347, %v351
    %v353 = vlaneseq
    %v354 = vshrl.u32 %v353, 7
    %v355 = vsub.s32 1, %v354
    %v356 = vrot.slane %v347, %v355
    %v391 = vunpack.c.l.b16 %v315
    %v392 = vunpack.c.h.b16 %v315
    %v393 = vunpack.c.l.b16 %v316
    %v394 = vunpack.c.h.b16 %v316
    %v395 = vunpack.c.l.b16 %v317
    %v396 = vunpack.c.h.b16 %v317
    %v397 = vunpack.c.l.b16 %v318
    %v398 = vunpack.c.h.b16 %v318
    %v399 = vunpack.c.l.b16 %v319
    %v400 = vunpack.c.h.b16 %v319
    %v401 = vunpack.c.l.b16 %v320
    %v402 = vunpack.c.h.b16 %v320
    %v403 = vunpack.c.l.b16 %v321
    %v404 = vunpack.c.h.b16 %v321
    %v405 = vunpack.c.l.b16 %v322
    %v406 = vunpack.c.h.b16 %v322
    %v407 = vunpack.c.l.b16 %v323
    %v408 = vunpack.c.h.b16 %v323
    %v409 = vunpack.c.l.b16 %v324
    %v410 = vunpack.c.h.b16 %v324
    %v411 = vunpack.c.l.b16 %v325
    %v412 = vunpack.c.h.b16 %v325
    %v413 = vunpack.c.l.b16 %v326
    %v414 = vunpack.c.h.b16 %v326
    %v415 = vunpack.c.l.b16 %v327
    %v416 = vunpack.c.h.b16 %v327
    %v417 = vunpack.c.l.b16 %v328
    %v418 = vunpack.c.h.b16 %v328
    %v419 = vunpack.c.l.b16 %v329
    %v420 = vunpack.c.h.b16 %v329
    %v421 = vunpack.c.l.b16 %v330
    %v422 = vunpack.c.h.b16 %v330
    %v423 = vunpack.c.l.b16 %v331
    %v424 = vunpack.c.h.b16 %v331
    %v425 = vunpack.c.l.b16 %v332
    %v426 = vunpack.c.h.b16 %v332
    %v427 = vunpack.c.l.b16 %v333
    %v428 = vunpack.c.h.b16 %v333
    %v429 = vunpack.c.l.b16 %v334
    %v430 = vunpack.c.h.b16 %v334
    %v431 = vunpack.c.l.b16 %v335
    %v432 = vunpack.c.h.b16 %v335
    %v433 = vunpack.c.l.b16 %v336
    %v434 = vunpack.c.h.b16 %v336
    %v435 = vunpack.c.l.b16 %v337
    %v436 = vunpack.c.h.b16 %v337
    %v437 = vunpack.c.l.b16 %v338
    %v438 = vunpack.c.h.b16 %v338
    %v439 = vunpack.c.l.b16 %v339
    %v440 = vunpack.c.h.b16 %v339
    %v441 = vunpack.c.l.b16 %v340
    %v442 = vunpack.c.h.b16 %v340
    %v443 = vunpack.c.l.b16 %v341
    %v444 = vunpack.c.h.b16 %v341
    %v445 = vunpack.c.l.b16 %v342
    %v446 = vunpack.c.h.b16 %v342
    %v447 = vunpack.c.l.b16 %v343
    %v448 = vunpack.c.h.b16 %v343
    %v449 = vunpack.c.l.b16 %v344
    %v450 = vunpack.c.h.b16 %v344
    %v451 = vunpack.c.l.b16 %v345
    %v452 = vunpack.c.h.b16 %v345
    %v453 = vunpack.c.l.b16 %v346
    %v454 = vunpack.c.h.b16 %v346
    %v455 = vpack.c.b16 %v393, %v391
    %v456 = vpack.c.b16 %v394, %v392
    %v457 = vpack.c.b16 %v397, %v395
    %v458 = vpack.c.b16 %v398, %v396
    %v459 = vpack.c.b16 %v401, %v399
    %v460 = vpack.c.b16 %v402, %v400
    %v461 = vpack.c.b16 %v405, %v403
    %v462 = vpack.c.b16 %v406, %v404
    %v463 = vpack.c.b16 %v409, %v407
    %v464 = vpack.c.b16 %v410, %v408
    %v465 = vpack.c.b16 %v413, %v411
    %v466 = vpack.c.b16 %v414, %v412
    %v467 = vpack.c.b16 %v417, %v415
    %v468 = vpack.c.b16 %v418, %v416
    %v469 = vpack.c.b16 %v421, %v419
    %v470 = vpack.c.b16 %v422, %v420
    %v471 = vpack.c.b16 %v425, %v423
    %v472 = vpack.c.b16 %v426, %v424
    %v473 = vpack.c.b16 %v429, %v427
    %v474 = vpack.c.b16 %v430, %v428
    %v475 = vpack.c.b16 %v433, %v431
    %v476 = vpack.c.b16 %v434, %v432
    %v477 = vpack.c.b16 %v437, %v435
    %v478 = vpack.c.b16 %v438, %v436
    %v479 = vpack.c.b16 %v441, %v439
    %v480 = vpack.c.b16 %v442, %v440
    %v481 = vpack.c.b16 %v445, %v443
    %v482 = vpack.c.b16 %v446, %v444
    %v483 = vpack.c.b16 %v449, %v447
    %v484 = vpack.c.b16 %v450, %v448
    %v485 = vpack.c.b16 %v453, %v451
    %v486 = vpack.c.b16 %v454, %v452
    %519 = vmatprep.subr.bf16.mxu0 %v456
    %520 = vmatpush1.bf16.msra.mxu0 %v455
    %521 = vmatprep.subr.bf16.mxu0 %v458
    %522 = vmatpush1.bf16.msra.mxu0 %v457
    %523 = vmatprep.subr.bf16.mxu0 %v460
    %524 = vmatpush1.bf16.msra.mxu0 %v459
    %525 = vmatprep.subr.bf16.mxu0 %v462
    %526 = vmatpush1.bf16.msra.mxu0 %v461
    %527 = vmatprep.subr.bf16.mxu0 %v464
    %528 = vmatpush1.bf16.msra.mxu0 %v463
    %529 = vmatprep.subr.bf16.mxu0 %v466
    %530 = vmatpush1.bf16.msra.mxu0 %v465
    %531 = vmatprep.subr.bf16.mxu0 %v468
    %532 = vmatpush1.bf16.msra.mxu0 %v467
    %533 = vmatprep.subr.bf16.mxu0 %v470
    %534 = vmatpush1.bf16.msra.mxu0 %v469
    %535 = vmatprep.subr.bf16.mxu0 %v472
    %536 = vmatpush1.bf16.msra.mxu0 %v471
    %537 = vmatprep.subr.bf16.mxu0 %v474
    %538 = vmatpush1.bf16.msra.mxu0 %v473
    %539 = vmatprep.subr.bf16.mxu0 %v476
    %540 = vmatpush1.bf16.msra.mxu0 %v475
    %541 = vmatprep.subr.bf16.mxu0 %v478
    %542 = vmatpush1.bf16.msra.mxu0 %v477
    %543 = vmatprep.subr.bf16.mxu0 %v480
    %544 = vmatpush1.bf16.msra.mxu0 %v479
    %545 = vmatprep.subr.bf16.mxu0 %v482
    %546 = vmatpush1.bf16.msra.mxu0 %v481
    %547 = vmatprep.subr.bf16.mxu0 %v484
    %548 = vmatpush1.bf16.msra.mxu0 %v483
    %549 = vmatprep.subr.bf16.mxu0 %v486
    %550 = vmatpush1.bf16.msra.mxu0 %v485
    %551 = vmatprep.mubr.bf16.mxu0 %v314
    %552 = vmatmul.mubr.bf16.gmra.mrb[0].mxu0 %v313
    %v553 = vpop.f32.mrb[0].mxu0
    %v554 = vadd.f32 %v352, %v553
    %v555 = vpop.f32.mrb[0].mxu0
    %v556 = vadd.f32 %v356, %v555
    %v557 = vpop.f32.mrb[0].mxu0
    %v558 = vpop.f32.mrb[0].mxu0
    %559 = vdwg.mxu0
    %v560 = vmax.f32 %v554, 0.0
    %v561 = vmax.f32 %v556, 0.0
    %v562 = vpack.c.bf16 %v560, %v560
    %v563 = vpack.c.bf16 %v561, %v561
    %v564 = vld [vmem:[#allocation4] sm:$0xf]
    %v565 = vld [vmem:[#allocation4 + $0x4] sm:$0xf]
    %v566 = vld [vmem:[#allocation4 + $0x8] sm:$0xf]
    %v567 = vld [vmem:[#allocation4 + $0xc] sm:$0xf]
    %v568 = vld [vmem:[#allocation4 + $0x10] sm:$0xf]
    %v569 = vld [vmem:[#allocation4 + $0x14] sm:$0xf]
    %v570 = vld [vmem:[#allocation4 + $0x18] sm:$0xf]
    %v571 = vld [vmem:[#allocation4 + $0x1c] sm:$0xf]
    %v572 = vld [vmem:[#allocation4 + $0x20] sm:$0xf]
    %v573 = vld [vmem:[#allocation4 + $0x24] sm:$0xf]
    %v574 = vld [vmem:[#allocation4 + $0x28] sm:$0xf]
    %v575 = vld [vmem:[#allocation4 + $0x2c] sm:$0xf]
    %v576 = vld [vmem:[#allocation4 + $0x30] sm:$0xf]
    %v577 = vld [vmem:[#allocation4 + $0x34] sm:$0xf]
    %v578 = vld [vmem:[#allocation4 + $0x38] sm:$0xf]
    %v579 = vld [vmem:[#allocation4 + $0x3c] sm:$0xf]
    %v580 = vld [vmem:[#allocation4 + $0x40] sm:$0xf]
    %v581 = vld [vmem:[#allocation4 + $0x44] sm:$0xf]
    %v582 = vld [vmem:[#allocation4 + $0x48] sm:$0xf]
    %v583 = vld [vmem:[#allocation4 + $0x4c] sm:$0xf]
    %v584 = vld [vmem:[#allocation4 + $0x50] sm:$0xf]
    %v585 = vld [vmem:[#allocation4 + $0x54] sm:$0xf]
    %v586 = vld [vmem:[#allocation4 + $0x58] sm:$0xf]
    %v587 = vld [vmem:[#allocation4 + $0x5c] sm:$0xf]
    %v588 = vld [vmem:[#allocation4 + $0x60] sm:$0xf]
    %v589 = vld [vmem:[#allocation4 + $0x64] sm:$0xf]
    %v590 = vld [vmem:[#allocation4 + $0x68] sm:$0xf]
    %v591 = vld [vmem:[#allocation4 + $0x6c] sm:$0xf]
    %v592 = vld [vmem:[#allocation4 + $0x70] sm:$0xf]
    %v593 = vld [vmem:[#allocation4 + $0x74] sm:$0xf]
    %v594 = vld [vmem:[#allocation4 + $0x78] sm:$0xf]
    %v595 = vld [vmem:[#allocation4 + $0x7c] sm:$0xf]
    %v596 = vld [vmem:[#allocation6] sm:$0x1]
    %v598 = vlaneseq
    %v599 = vshrl.u32 %v598, 7
    %v600 = vsub.s32 0, %v599
    %v601 = vrot.slane %v596, %v600
    %v635 = vunpack.c.l.b16 %v564
    %v636 = vunpack.c.l.b16 %v565
    %v637 = vunpack.c.l.b16 %v566
    %v638 = vunpack.c.l.b16 %v567
    %v639 = vunpack.c.l.b16 %v568
    %v640 = vunpack.c.l.b16 %v569
    %v641 = vunpack.c.l.b16 %v570
    %v642 = vunpack.c.l.b16 %v571
    %v643 = vunpack.c.l.b16 %v572
    %v644 = vunpack.c.l.b16 %v573
    %v645 = vunpack.c.l.b16 %v574
    %v646 = vunpack.c.l.b16 %v575
    %v647 = vunpack.c.l.b16 %v576
    %v648 = vunpack.c.l.b16 %v577
    %v649 = vunpack.c.l.b16 %v578
    %v650 = vunpack.c.l.b16 %v579
    %v651 = vunpack.c.l.b16 %v580
    %v652 = vunpack.c.l.b16 %v581
    %v653 = vunpack.c.l.b16 %v582
    %v654 = vunpack.c.l.b16 %v583
    %v655 = vunpack.c.l.b16 %v584
    %v656 = vunpack.c.l.b16 %v585
    %v657 = vunpack.c.l.b16 %v586
    %v658 = vunpack.c.l.b16 %v587
    %v659 = vunpack.c.l.b16 %v588
    %v660 = vunpack.c.l.b16 %v589
    %v661 = vunpack.c.l.b16 %v590
    %v662 = vunpack.c.l.b16 %v591
    %v663 = vunpack.c.l.b16 %v592
    %v664 = vunpack.c.l.b16 %v593
    %v665 = vunpack.c.l.b16 %v594
    %v666 = vunpack.c.l.b16 %v595
    %v667 = vpack.c.b16 %v636, %v635
    %v668 = vpack.c.b16 %v638, %v637
    %v669 = vpack.c.b16 %v640, %v639
    %v670 = vpack.c.b16 %v642, %v641
    %v671 = vpack.c.b16 %v644, %v643
    %v672 = vpack.c.b16 %v646, %v645
    %v673 = vpack.c.b16 %v648, %v647
    %v674 = vpack.c.b16 %v650, %v649
    %v675 = vpack.c.b16 %v652, %v651
    %v676 = vpack.c.b16 %v654, %v653
    %v677 = vpack.c.b16 %v656, %v655
    %v678 = vpack.c.b16 %v658, %v657
    %v679 = vpack.c.b16 %v660, %v659
    %v680 = vpack.c.b16 %v662, %v661
    %v681 = vpack.c.b16 %v664, %v663
    %v682 = vpack.c.b16 %v666, %v665
    %699 = vmatprep.subr.bf16.mxu0 0
    %700 = vmatpush1.bf16.msra.mxu0 %v667
    %701 = vmatprep.subr.bf16.mxu0 0
    %702 = vmatpush1.bf16.msra.mxu0 %v668
    %703 = vmatprep.subr.bf16.mxu0 0
    %704 = vmatpush1.bf16.msra.mxu0 %v669
    %705 = vmatprep.subr.bf16.mxu0 0
    %706 = vmatpush1.bf16.msra.mxu0 %v670
    %707 = vmatprep.subr.bf16.mxu0 0
    %708 = vmatpush1.bf16.msra.mxu0 %v671
    %709 = vmatprep.subr.bf16.mxu0 0
    %710 = vmatpush1.bf16.msra.mxu0 %v672
    %711 = vmatprep.subr.bf16.mxu0 0
    %712 = vmatpush1.bf16.msra.mxu0 %v673
    %713 = vmatprep.subr.bf16.mxu0 0
    %714 = vmatpush1.bf16.msra.mxu0 %v674
    %715 = vmatprep.subr.bf16.mxu0 0
    %716 = vmatpush1.bf16.msra.mxu0 %v675
    %717 = vmatprep.subr.bf16.mxu0 0
    %718 = vmatpush1.bf16.msra.mxu0 %v676
    %719 = vmatprep.subr.bf16.mxu0 0
    %720 = vmatpush1.bf16.msra.mxu0 %v677
    %721 = vmatprep.subr.bf16.mxu0 0
    %722 = vmatpush1.bf16.msra.mxu0 %v678
    %723 = vmatprep.subr.bf16.mxu0 0
    %724 = vmatpush1.bf16.msra.mxu0 %v679
    %725 = vmatprep.subr.bf16.mxu0 0
    %726 = vmatpush1.bf16.msra.mxu0 %v680
    %727 = vmatprep.subr.bf16.mxu0 0
    %728 = vmatpush1.bf16.msra.mxu0 %v681
    %729 = vmatprep.subr.bf16.mxu0 0
    %730 = vmatpush1.bf16.msra.mxu0 %v682
    %731 = vmatprep.mubr.bf16.mxu0 %v563
    %732 = vmatmul.mubr.bf16.gmra.mrb[0].mxu0 %v562
    %v733 = vpop.f32.mrb[0].mxu0
    %v734 = vadd.f32 %v601, %v733
    %v735 = vpop.f32.mrb[0].mxu0
    %v736 = vpop.f32.mrb[0].mxu0
    %v737 = vpop.f32.mrb[0].mxu0
    %738 = vdwg.mxu0
    %v739 = vpack.c.bf16 %v734, %v734
    %v740 = vld [vmem:[#allocation7] sm:$0xff]
    %v741 = vld [vmem:[#allocation7 + $0x8] sm:$0xff]
    %v742 = vld [vmem:[#allocation7 + $0x10] sm:$0xff]
    %v743 = vld [vmem:[#allocation7 + $0x18] sm:$0xff]
    %v744 = vld [vmem:[#allocation7 + $0x20] sm:$0xff]
    %v745 = vld [vmem:[#allocation7 + $0x28] sm:$0xff]
    %v746 = vld [vmem:[#allocation7 + $0x30] sm:$0xff]
    %v747 = vld [vmem:[#allocation7 + $0x38] sm:$0xff]
    %v748 = vld [vmem:[#allocation7 + $0x40] sm:$0xff]
    %v749 = vld [vmem:[#allocation7 + $0x48] sm:$0xff]
    %v750 = vld [vmem:[#allocation7 + $0x50] sm:$0xff]
    %v751 = vld [vmem:[#allocation7 + $0x58] sm:$0xff]
    %v752 = vld [vmem:[#allocation7 + $0x60] sm:$0xff]
    %v753 = vld [vmem:[#allocation7 + $0x68] sm:$0xff]
    %v754 = vld [vmem:[#allocation7 + $0x70] sm:$0xff]
    %v755 = vld [vmem:[#allocation7 + $0x78] sm:$0xff]
    %v756 = vld [vmem:[%s17] sm:$0x3]
    %v758 = vlaneseq
    %v759 = vshrl.u32 %v758, 7
    %v760 = vsub.s32 0, %v759
    %v761 = vrot.slane %v756, %v760
    %v762 = vlaneseq
    %v763 = vshrl.u32 %v762, 7
    %v764 = vsub.s32 1, %v763
    %v765 = vrot.slane %v756, %v764
    %v784 = vunpack.c.l.b16 %v740
    %v785 = vunpack.c.h.b16 %v740
    %v786 = vunpack.c.l.b16 %v741
    %v787 = vunpack.c.h.b16 %v741
    %v788 = vunpack.c.l.b16 %v742
    %v789 = vunpack.c.h.b16 %v742
    %v790 = vunpack.c.l.b16 %v743
    %v791 = vunpack.c.h.b16 %v743
    %v792 = vunpack.c.l.b16 %v744
    %v793 = vunpack.c.h.b16 %v744
    %v794 = vunpack.c.l.b16 %v745
    %v795 = vunpack.c.h.b16 %v745
    %v796 = vunpack.c.l.b16 %v746
    %v797 = vunpack.c.h.b16 %v746
    %v798 = vunpack.c.l.b16 %v747
    %v799 = vunpack.c.h.b16 %v747
    %v800 = vunpack.c.l.b16 %v748
    %v801 = vunpack.c.h.b16 %v748
    %v802 = vunpack.c.l.b16 %v749
    %v803 = vunpack.c.h.b16 %v749
    %v804 = vunpack.c.l.b16 %v750
    %v805 = vunpack.c.h.b16 %v750
    %v806 = vunpack.c.l.b16 %v751
    %v807 = vunpack.c.h.b16 %v751
    %v808 = vunpack.c.l.b16 %v752
    %v809 = vunpack.c.h.b16 %v752
    %v810 = vunpack.c.l.b16 %v753
    %v811 = vunpack.c.h.b16 %v753
    %v812 = vunpack.c.l.b16 %v754
    %v813 = vunpack.c.h.b16 %v754
    %v814 = vunpack.c.l.b16 %v755
    %v815 = vunpack.c.h.b16 %v755
    %v816 = vpack.c.b16 %v786, %v784
    %v817 = vpack.c.b16 %v787, %v785
    %v818 = vpack.c.b16 %v790, %v788
    %v819 = vpack.c.b16 %v791, %v789
    %v820 = vpack.c.b16 %v794, %v792
    %v821 = vpack.c.b16 %v795, %v793
    %v822 = vpack.c.b16 %v798, %v796
    %v823 = vpack.c.b16 %v799, %v797
    %v824 = vpack.c.b16 %v802, %v800
    %v825 = vpack.c.b16 %v803, %v801
    %v826 = vpack.c.b16 %v806, %v804
    %v827 = vpack.c.b16 %v807, %v805
    %v828 = vpack.c.b16 %v810, %v808
    %v829 = vpack.c.b16 %v811, %v809
    %v830 = vpack.c.b16 %v814, %v812
    %v831 = vpack.c.b16 %v815, %v813
    %848 = vmatprep.subr.bf16.mxu0 %v817
    %849 = vmatpush1.bf16.msra.mxu0 %v816
    %850 = vmatprep.subr.bf16.mxu0 %v819
    %851 = vmatpush1.bf16.msra.mxu0 %v818
    %852 = vmatprep.subr.bf16.mxu0 %v821
    %853 = vmatpush1.bf16.msra.mxu0 %v820
    %854 = vmatprep.subr.bf16.mxu0 %v823
    %855 = vmatpush1.bf16.msra.mxu0 %v822
    %856 = vmatprep.subr.bf16.mxu0 %v825
    %857 = vmatpush1.bf16.msra.mxu0 %v824
    %858 = vmatprep.subr.bf16.mxu0 %v827
    %859 = vmatpush1.bf16.msra.mxu0 %v826
    %860 = vmatprep.subr.bf16.mxu0 %v829
    %861 = vmatpush1.bf16.msra.mxu0 %v828
    %862 = vmatprep.subr.bf16.mxu0 %v831
    %863 = vmatpush1.bf16.msra.mxu0 %v830
    %864 = vmatprep.subr.bf16.mxu0 0
    %865 = vmatpush1.bf16.msra.mxu0 0
    %866 = vmatprep.subr.bf16.mxu0 0
    %867 = vmatpush1.bf16.msra.mxu0 0
    %868 = vmatprep.subr.bf16.mxu0 0
    %869 = vmatpush1.bf16.msra.mxu0 0
    %870 = vmatprep.subr.bf16.mxu0 0
    %871 = vmatpush1.bf16.msra.mxu0 0
    %872 = vmatprep.subr.bf16.mxu0 0
    %873 = vmatpush1.bf16.msra.mxu0 0
    %874 = vmatprep.subr.bf16.mxu0 0
    %875 = vmatpush1.bf16.msra.mxu0 0
    %876 = vmatprep.subr.bf16.mxu0 0
    %877 = vmatpush1.bf16.msra.mxu0 0
    %878 = vmatprep.subr.bf16.mxu0 0
    %879 = vmatpush1.bf16.msra.mxu0 0
    %880 = vmatprep.mubr.bf16.mxu0 0
    %881 = vmatmul.mubr.bf16.gmra.mrb[0].mxu0 %v739
    %v882 = vpop.f32.mrb[0].mxu0
    %v883 = vadd.f32 %v761, %v882
    %v884 = vpop.f32.mrb[0].mxu0
    %v885 = vadd.f32 %v765, %v884
    %v886 = vpop.f32.mrb[0].mxu0
    %v887 = vpop.f32.mrb[0].mxu0
    %888 = vdwg.mxu0
    %v889 = vmax.f32 %v883, 0.0
    %v890 = vmax.f32 %v885, 0.0
    %v891 = vmax.f32 %v734, 0.0
    %v892 = vpack.c.bf16 %v891, %v891
    %v893 = vld [vmem:[#allocation9] sm:$0xf]
    %v894 = vld [vmem:[#allocation9 + $0x4] sm:$0xf]
    %v895 = vld [vmem:[#allocation9 + $0x8] sm:$0xf]
    %v896 = vld [vmem:[#allocation9 + $0xc] sm:$0xf]
    %v897 = vld [vmem:[#allocation9 + $0x10] sm:$0xf]
    %v898 = vld [vmem:[#allocation9 + $0x14] sm:$0xf]
    %v899 = vld [vmem:[#allocation9 + $0x18] sm:$0xf]
    %v900 = vld [vmem:[#allocation9 + $0x1c] sm:$0xf]
    %v901 = vld [vmem:[#allocation9 + $0x20] sm:$0xf]
    %v902 = vld [vmem:[#allocation9 + $0x24] sm:$0xf]
    %v903 = vld [vmem:[#allocation9 + $0x28] sm:$0xf]
    %v904 = vld [vmem:[#allocation9 + $0x2c] sm:$0xf]
    %v905 = vld [vmem:[#allocation9 + $0x30] sm:$0xf]
    %v906 = vld [vmem:[#allocation9 + $0x34] sm:$0xf]
    %v907 = vld [vmem:[#allocation9 + $0x38] sm:$0xf]
    %v908 = vld [vmem:[#allocation9 + $0x3c] sm:$0xf]
    %v909 = vpack.c.bf16 %v889, %v889
    %v910 = vpack.c.bf16 %v890, %v890
    %v911 = vld [vmem:[#allocation10] sm:$0xf]
    %v912 = vld [vmem:[#allocation10 + $0x4] sm:$0xf]
    %v913 = vld [vmem:[#allocation10 + $0x8] sm:$0xf]
    %v914 = vld [vmem:[#allocation10 + $0xc] sm:$0xf]
    %v915 = vld [vmem:[#allocation10 + $0x10] sm:$0xf]
    %v916 = vld [vmem:[#allocation10 + $0x14] sm:$0xf]
    %v917 = vld [vmem:[#allocation10 + $0x18] sm:$0xf]
    %v918 = vld [vmem:[#allocation10 + $0x1c] sm:$0xf]
    %v919 = vld [vmem:[#allocation10 + $0x20] sm:$0xf]
    %v920 = vld [vmem:[#allocation10 + $0x24] sm:$0xf]
    %v921 = vld [vmem:[#allocation10 + $0x28] sm:$0xf]
    %v922 = vld [vmem:[#allocation10 + $0x2c] sm:$0xf]
    %v923 = vld [vmem:[#allocation10 + $0x30] sm:$0xf]
    %v924 = vld [vmem:[#allocation10 + $0x34] sm:$0xf]
    %v925 = vld [vmem:[#allocation10 + $0x38] sm:$0xf]
    %v926 = vld [vmem:[#allocation10 + $0x3c] sm:$0xf]
    %v927 = vld [vmem:[#allocation10 + $0x40] sm:$0xf]
    %v928 = vld [vmem:[#allocation10 + $0x44] sm:$0xf]
    %v929 = vld [vmem:[#allocation10 + $0x48] sm:$0xf]
    %v930 = vld [vmem:[#allocation10 + $0x4c] sm:$0xf]
    %v931 = vld [vmem:[#allocation10 + $0x50] sm:$0xf]
    %v932 = vld [vmem:[#allocation10 + $0x54] sm:$0xf]
    %v933 = vld [vmem:[#allocation10 + $0x58] sm:$0xf]
    %v934 = vld [vmem:[#allocation10 + $0x5c] sm:$0xf]
    %v935 = vld [vmem:[#allocation10 + $0x60] sm:$0xf]
    %v936 = vld [vmem:[#allocation10 + $0x64] sm:$0xf]
    %v937 = vld [vmem:[#allocation10 + $0x68] sm:$0xf]
    %v938 = vld [vmem:[#allocation10 + $0x6c] sm:$0xf]
    %v939 = vld [vmem:[#allocation10 + $0x70] sm:$0xf]
    %v940 = vld [vmem:[#allocation10 + $0x74] sm:$0xf]
    %v941 = vld [vmem:[#allocation10 + $0x78] sm:$0xf]
    %v942 = vld [vmem:[#allocation10 + $0x7c] sm:$0xf]
    %v975 = vunpack.c.l.b16 %v911
    %v976 = vunpack.c.l.b16 %v912
    %v977 = vunpack.c.l.b16 %v913
    %v978 = vunpack.c.l.b16 %v914
    %v979 = vunpack.c.l.b16 %v915
    %v980 = vunpack.c.l.b16 %v916
    %v981 = vunpack.c.l.b16 %v917
    %v982 = vunpack.c.l.b16 %v918
    %v983 = vunpack.c.l.b16 %v919
    %v984 = vunpack.c.l.b16 %v920
    %v985 = vunpack.c.l.b16 %v921
    %v986 = vunpack.c.l.b16 %v922
    %v987 = vunpack.c.l.b16 %v923
    %v988 = vunpack.c.l.b16 %v924
    %v989 = vunpack.c.l.b16 %v925
    %v990 = vunpack.c.l.b16 %v926
    %v991 = vunpack.c.l.b16 %v927
    %v992 = vunpack.c.l.b16 %v928
    %v993 = vunpack.c.l.b16 %v929
    %v994 = vunpack.c.l.b16 %v930
    %v995 = vunpack.c.l.b16 %v931
    %v996 = vunpack.c.l.b16 %v932
    %v997 = vunpack.c.l.b16 %v933
    %v998 = vunpack.c.l.b16 %v934
    %v999 = vunpack.c.l.b16 %v935
    %v1000 = vunpack.c.l.b16 %v936
    %v1001 = vunpack.c.l.b16 %v937
    %v1002 = vunpack.c.l.b16 %v938
    %v1003 = vunpack.c.l.b16 %v939
    %v1004 = vunpack.c.l.b16 %v940
    %v1005 = vunpack.c.l.b16 %v941
    %v1006 = vunpack.c.l.b16 %v942
    %v1007 = vpack.c.b16 %v976, %v975
    %v1008 = vpack.c.b16 %v978, %v977
    %v1009 = vpack.c.b16 %v980, %v979
    %v1010 = vpack.c.b16 %v982, %v981
    %v1011 = vpack.c.b16 %v984, %v983
    %v1012 = vpack.c.b16 %v986, %v985
    %v1013 = vpack.c.b16 %v988, %v987
    %v1014 = vpack.c.b16 %v990, %v989
    %v1015 = vpack.c.b16 %v992, %v991
    %v1016 = vpack.c.b16 %v994, %v993
    %v1017 = vpack.c.b16 %v996, %v995
    %v1018 = vpack.c.b16 %v998, %v997
    %v1019 = vpack.c.b16 %v1000, %v999
    %v1020 = vpack.c.b16 %v1002, %v1001
    %v1021 = vpack.c.b16 %v1004, %v1003
    %v1022 = vpack.c.b16 %v1006, %v1005
    %1039 = vmatprep.subr.bf16.mxu0 0
    %1040 = vmatpush1.bf16.msra.mxu0 %v1007
    %1041 = vmatprep.subr.bf16.mxu0 0
    %1042 = vmatpush1.bf16.msra.mxu0 %v1008
    %1043 = vmatprep.subr.bf16.mxu0 0
    %1044 = vmatpush1.bf16.msra.mxu0 %v1009
    %1045 = vmatprep.subr.bf16.mxu0 0
    %1046 = vmatpush1.bf16.msra.mxu0 %v1010
    %1047 = vmatprep.subr.bf16.mxu0 0
    %1048 = vmatpush1.bf16.msra.mxu0 %v1011
    %1049 = vmatprep.subr.bf16.mxu0 0
    %1050 = vmatpush1.bf16.msra.mxu0 %v1012
    %1051 = vmatprep.subr.bf16.mxu0 0
    %1052 = vmatpush1.bf16.msra.mxu0 %v1013
    %1053 = vmatprep.subr.bf16.mxu0 0
    %1054 = vmatpush1.bf16.msra.mxu0 %v1014
    %1055 = vmatprep.subr.bf16.mxu0 0
    %1056 = vmatpush1.bf16.msra.mxu0 %v1015
    %1057 = vmatprep.subr.bf16.mxu0 0
    %1058 = vmatpush1.bf16.msra.mxu0 %v1016
    %1059 = vmatprep.subr.bf16.mxu0 0
    %1060 = vmatpush1.bf16.msra.mxu0 %v1017
    %1061 = vmatprep.subr.bf16.mxu0 0
    %1062 = vmatpush1.bf16.msra.mxu0 %v1018
    %1063 = vmatprep.subr.bf16.mxu0 0
    %1064 = vmatpush1.bf16.msra.mxu0 %v1019
    %1065 = vmatprep.subr.bf16.mxu0 0
    %1066 = vmatpush1.bf16.msra.mxu0 %v1020
    %1067 = vmatprep.subr.bf16.mxu0 0
    %1068 = vmatpush1.bf16.msra.mxu0 %v1021
    %1069 = vmatprep.subr.bf16.mxu0 0
    %1070 = vmatpush1.bf16.msra.mxu0 %v1022
    %1071 = vmatprep.mubr.bf16.mxu0 %v910
    %1072 = vmatmul.mubr.bf16.gmra.mrb[0].mxu0 %v909
    %v1073 = vpop.f32.mrb[0].mxu0
    %v1074 = vadd.f32 0.0, %v1073
    %v1075 = vpop.f32.mrb[0].mxu0
    %v1076 = vpop.f32.mrb[0].mxu0
    %v1077 = vpop.f32.mrb[0].mxu0
    %1078 = vdwg.mxu0
    %v1095 = vunpack.c.l.b16 %v893
    %v1096 = vunpack.c.l.b16 %v894
    %v1097 = vunpack.c.l.b16 %v895
    %v1098 = vunpack.c.l.b16 %v896
    %v1099 = vunpack.c.l.b16 %v897
    %v1100 = vunpack.c.l.b16 %v898
    %v1101 = vunpack.c.l.b16 %v899
    %v1102 = vunpack.c.l.b16 %v900
    %v1103 = vunpack.c.l.b16 %v901
    %v1104 = vunpack.c.l.b16 %v902
    %v1105 = vunpack.c.l.b16 %v903
    %v1106 = vunpack.c.l.b16 %v904
    %v1107 = vunpack.c.l.b16 %v905
    %v1108 = vunpack.c.l.b16 %v906
    %v1109 = vunpack.c.l.b16 %v907
    %v1110 = vunpack.c.l.b16 %v908
    %v1111 = vpack.c.b16 %v1096, %v1095
    %v1112 = vpack.c.b16 %v1098, %v1097
    %v1113 = vpack.c.b16 %v1100, %v1099
    %v1114 = vpack.c.b16 %v1102, %v1101
    %v1115 = vpack.c.b16 %v1104, %v1103
    %v1116 = vpack.c.b16 %v1106, %v1105
    %v1117 = vpack.c.b16 %v1108, %v1107
    %v1118 = vpack.c.b16 %v1110, %v1109
    %1127 = vmatprep.subr.bf16.mxu0 0
    %1128 = vmatpush1.bf16.msra.mxu0 %v1111
    %1129 = vmatprep.subr.bf16.mxu0 0
    %1130 = vmatpush1.bf16.msra.mxu0 %v1112
    %1131 = vmatprep.subr.bf16.mxu0 0
    %1132 = vmatpush1.bf16.msra.mxu0 %v1113
    %1133 = vmatprep.subr.bf16.mxu0 0
    %1134 = vmatpush1.bf16.msra.mxu0 %v1114
    %1135 = vmatprep.subr.bf16.mxu0 0
    %1136 = vmatpush1.bf16.msra.mxu0 %v1115
    %1137 = vmatprep.subr.bf16.mxu0 0
    %1138 = vmatpush1.bf16.msra.mxu0 %v1116
    %1139 = vmatprep.subr.bf16.mxu0 0
    %1140 = vmatpush1.bf16.msra.mxu0 %v1117
    %1141 = vmatprep.subr.bf16.mxu0 0
    %1142 = vmatpush1.bf16.msra.mxu0 %v1118
    %1143 = vmatprep.subr.bf16.mxu0 0
    %1144 = vmatpush1.bf16.msra.mxu0 0
    %1145 = vmatprep.subr.bf16.mxu0 0
    %1146 = vmatpush1.bf16.msra.mxu0 0
    %1147 = vmatprep.subr.bf16.mxu0 0
    %1148 = vmatpush1.bf16.msra.mxu0 0
    %1149 = vmatprep.subr.bf16.mxu0 0
    %1150 = vmatpush1.bf16.msra.mxu0 0
    %1151 = vmatprep.subr.bf16.mxu0 0
    %1152 = vmatpush1.bf16.msra.mxu0 0
    %1153 = vmatprep.subr.bf16.mxu0 0
    %1154 = vmatpush1.bf16.msra.mxu0 0
    %1155 = vmatprep.subr.bf16.mxu0 0
    %1156 = vmatpush1.bf16.msra.mxu0 0
    %1157 = vmatprep.subr.bf16.mxu0 0
    %1158 = vmatpush1.bf16.msra.mxu0 0
    %1159 = vmatprep.mubr.bf16.mxu0 0
    %1160 = vmatmul.mubr.bf16.gmra.mrb[0].mxu0 %v892
    %v1161 = vpop.f32.mrb[0].mxu0
    %v1162 = vadd.f32 %v1074, %v1161
    %v1163 = vpop.f32.mrb[0].mxu0
    %v1164 = vpop.f32.mrb[0].mxu0
    %v1165 = vpop.f32.mrb[0].mxu0
    %1166 = vdwg.mxu0
    %v1167 = vld [vmem:[#allocation12] sm:$0x1]
    %v1169 = vlaneseq
    %v1170 = vshrl.u32 %v1169, 7
    %v1171 = vsub.s32 0, %v1170
    %v1172 = vrot.slane %v1167, %v1171
    %v1174 = vadd.f32 %v1162, %v1172
    %v1175 = vld [vmem:[%s25] sm:$0xf]
    %v1176 = vld [vmem:[%s25 + $0x4] sm:$0xf]
    %v1177 = vld [vmem:[%s25 + $0x8] sm:$0xf]
    %v1178 = vld [vmem:[%s25 + $0xc] sm:$0xf]
    %v1179 = vld [vmem:[%s25 + $0x10] sm:$0xf]
    %v1180 = vld [vmem:[%s25 + $0x14] sm:$0xf]
    %v1181 = vld [vmem:[%s25 + $0x18] sm:$0xf]
    %v1182 = vld [vmem:[%s25 + $0x1c] sm:$0xf]
    %v1183 = vld [vmem:[%s25 + $0x20] sm:$0xf]
    %v1184 = vld [vmem:[%s25 + $0x24] sm:$0xf]
    %v1185 = vld [vmem:[%s25 + $0x28] sm:$0xf]
    %v1186 = vld [vmem:[%s25 + $0x2c] sm:$0xf]
    %v1187 = vld [vmem:[%s25 + $0x30] sm:$0xf]
    %v1188 = vld [vmem:[%s25 + $0x34] sm:$0xf]
    %v1189 = vld [vmem:[%s25 + $0x38] sm:$0xf]
    %v1190 = vld [vmem:[%s25 + $0x3c] sm:$0xf]
    %v1191 = vld [vmem:[#allocation13] sm:$0x1]
    %v1193 = vlaneseq
    %v1194 = vshrl.u32 %v1193, 7
    %v1195 = vsub.s32 0, %v1194
    %v1196 = vrot.slane %v1191, %v1195
    %v1214 = vunpack.c.l.b16 %v1175
    %v1215 = vunpack.c.l.b16 %v1176
    %v1216 = vunpack.c.l.b16 %v1177
    %v1217 = vunpack.c.l.b16 %v1178
    %v1218 = vunpack.c.l.b16 %v1179
    %v1219 = vunpack.c.l.b16 %v1180
    %v1220 = vunpack.c.l.b16 %v1181
    %v1221 = vunpack.c.l.b16 %v1182
    %v1222 = vunpack.c.l.b16 %v1183
    %v1223 = vunpack.c.l.b16 %v1184
    %v1224 = vunpack.c.l.b16 %v1185
    %v1225 = vunpack.c.l.b16 %v1186
    %v1226 = vunpack.c.l.b16 %v1187
    %v1227 = vunpack.c.l.b16 %v1188
    %v1228 = vunpack.c.l.b16 %v1189
    %v1229 = vunpack.c.l.b16 %v1190
    %v1230 = vpack.c.b16 %v1215, %v1214
    %v1231 = vpack.c.b16 %v1217, %v1216
    %v1232 = vpack.c.b16 %v1219, %v1218
    %v1233 = vpack.c.b16 %v1221, %v1220
    %v1234 = vpack.c.b16 %v1223, %v1222
    %v1235 = vpack.c.b16 %v1225, %v1224
    %v1236 = vpack.c.b16 %v1227, %v1226
    %v1237 = vpack.c.b16 %v1229, %v1228
    %1246 = vmatprep.subr.bf16.mxu0 0
    %1247 = vmatpush1.bf16.msra.mxu0 %v1230
    %1248 = vmatprep.subr.bf16.mxu0 0
    %1249 = vmatpush1.bf16.msra.mxu0 %v1231
    %1250 = vmatprep.subr.bf16.mxu0 0
    %1251 = vmatpush1.bf16.msra.mxu0 %v1232
    %1252 = vmatprep.subr.bf16.mxu0 0
    %1253 = vmatpush1.bf16.msra.mxu0 %v1233
    %1254 = vmatprep.subr.bf16.mxu0 0
    %1255 = vmatpush1.bf16.msra.mxu0 %v1234
    %1256 = vmatprep.subr.bf16.mxu0 0
    %1257 = vmatpush1.bf16.msra.mxu0 %v1235
    %1258 = vmatprep.subr.bf16.mxu0 0
    %1259 = vmatpush1.bf16.msra.mxu0 %v1236
    %1260 = vmatprep.subr.bf16.mxu0 0
    %1261 = vmatpush1.bf16.msra.mxu0 %v1237
    %1262 = vmatprep.subr.bf16.mxu0 0
    %1263 = vmatpush1.bf16.msra.mxu0 0
    %1264 = vmatprep.subr.bf16.mxu0 0
    %1265 = vmatpush1.bf16.msra.mxu0 0
    %1266 = vmatprep.subr.bf16.mxu0 0
    %1267 = vmatpush1.bf16.msra.mxu0 0
    %1268 = vmatprep.subr.bf16.mxu0 0
    %1269 = vmatpush1.bf16.msra.mxu0 0
    %1270 = vmatprep.subr.bf16.mxu0 0
    %1271 = vmatpush1.bf16.msra.mxu0 0
    %1272 = vmatprep.subr.bf16.mxu0 0
    %1273 = vmatpush1.bf16.msra.mxu0 0
    %1274 = vmatprep.subr.bf16.mxu0 0
    %1275 = vmatpush1.bf16.msra.mxu0 0
    %1276 = vmatprep.subr.bf16.mxu0 0
    %1277 = vmatpush1.bf16.msra.mxu0 0
    %1278 = vmatprep.mubr.bf16.mxu0 0
    %1279 = vmatmul.mubr.bf16.gmra.mrb[0].mxu0 %v739
    %v1280 = vpop.f32.mrb[0].mxu0
    %v1281 = vadd.f32 %v1196, %v1280
    %v1282 = vpop.f32.mrb[0].mxu0
    %v1283 = vpop.f32.mrb[0].mxu0
    %v1284 = vpop.f32.mrb[0].mxu0
    %1285 = vdwg.mxu0
    %1286 = vmax.xlane.f32.xlu0 %v1281
    %v1287 = vpop.xlane.xlu0 %1286
    %v1288 = vsub.f32 %v1281, %v1287
    %v1289 = vmul.f32 %v1288, 1.442695
    %v1290 = vpow.pop %v1289
    %1291 = vadd.xlane.f32.xlu0 %v1290
    %v1292 = vpop.xlane.xlu0 %1291
    %v1293 = vlog2.pop %v1292
    %v1294 = vmul.f32 %v1293, 0.6931472
    %v1295 = vsub.f32 %v1288, %v1294
    %v1296 = vld [vmem:[%s3] sm:$0xff]
    %v1297 = vld [vmem:[%s5] sm:$0xff]
    %v1298 = vpack.c.bf16 %v1296, %v1296
    %v1299 = vld [vmem:[#allocation15] sm:$0xff]
    %v1300 = vld [vmem:[#allocation15 + $0x8] sm:$0xff]
    %v1301 = vld [vmem:[#allocation15 + $0x10] sm:$0xff]
    %v1302 = vld [vmem:[#allocation15 + $0x18] sm:$0xff]
    %v1303 = vld [vmem:[#allocation15 + $0x20] sm:$0xff]
    %v1304 = vld [vmem:[#allocation15 + $0x28] sm:$0xff]
    %v1305 = vld [vmem:[#allocation15 + $0x30] sm:$0xff]
    %v1306 = vld [vmem:[#allocation15 + $0x38] sm:$0xff]
    %v1307 = vld [vmem:[#allocation15 + $0x40] sm:$0xff]
    %v1308 = vld [vmem:[#allocation15 + $0x48] sm:$0xff]
    %v1309 = vld [vmem:[#allocation15 + $0x50] sm:$0xff]
    %v1310 = vld [vmem:[#allocation15 + $0x58] sm:$0xff]
    %v1311 = vld [vmem:[#allocation15 + $0x60] sm:$0xff]
    %v1312 = vld [vmem:[#allocation15 + $0x68] sm:$0xff]
    %v1313 = vld [vmem:[#allocation15 + $0x70] sm:$0xff]
    %v1314 = vld [vmem:[#allocation15 + $0x78] sm:$0xff]
    %v1315 = vld [vmem:[%s31] sm:$0x3]
    %v1317 = vlaneseq
    %v1318 = vshrl.u32 %v1317, 7
    %v1319 = vsub.s32 0, %v1318
    %v1320 = vrot.slane %v1315, %v1319
    %v1321 = vlaneseq
    %v1322 = vshrl.u32 %v1321, 7
    %v1323 = vsub.s32 1, %v1322
    %v1324 = vrot.slane %v1315, %v1323
    %v1343 = vunpack.c.l.b16 %v1299
    %v1344 = vunpack.c.h.b16 %v1299
    %v1345 = vunpack.c.l.b16 %v1300
    %v1346 = vunpack.c.h.b16 %v1300
    %v1347 = vunpack.c.l.b16 %v1301
    %v1348 = vunpack.c.h.b16 %v1301
    %v1349 = vunpack.c.l.b16 %v1302
    %v1350 = vunpack.c.h.b16 %v1302
    %v1351 = vunpack.c.l.b16 %v1303
    %v1352 = vunpack.c.h.b16 %v1303
    %v1353 = vunpack.c.l.b16 %v1304
    %v1354 = vunpack.c.h.b16 %v1304
    %v1355 = vunpack.c.l.b16 %v1305
    %v1356 = vunpack.c.h.b16 %v1305
    %v1357 = vunpack.c.l.b16 %v1306
    %v1358 = vunpack.c.h.b16 %v1306
    %v1359 = vunpack.c.l.b16 %v1307
    %v1360 = vunpack.c.h.b16 %v1307
    %v1361 = vunpack.c.l.b16 %v1308
    %v1362 = vunpack.c.h.b16 %v1308
    %v1363 = vunpack.c.l.b16 %v1309
    %v1364 = vunpack.c.h.b16 %v1309
    %v1365 = vunpack.c.l.b16 %v1310
    %v1366 = vunpack.c.h.b16 %v1310
    %v1367 = vunpack.c.l.b16 %v1311
    %v1368 = vunpack.c.h.b16 %v1311
    %v1369 = vunpack.c.l.b16 %v1312
    %v1370 = vunpack.c.h.b16 %v1312
    %v1371 = vunpack.c.l.b16 %v1313
    %v1372 = vunpack.c.h.b16 %v1313
    %v1373 = vunpack.c.l.b16 %v1314
    %v1374 = vunpack.c.h.b16 %v1314
    %v1375 = vpack.c.b16 %v1345, %v1343
    %v1376 = vpack.c.b16 %v1346, %v1344
    %v1377 = vpack.c.b16 %v1349, %v1347
    %v1378 = vpack.c.b16 %v1350, %v1348
    %v1379 = vpack.c.b16 %v1353, %v1351
    %v1380 = vpack.c.b16 %v1354, %v1352
    %v1381 = vpack.c.b16 %v1357, %v1355
    %v1382 = vpack.c.b16 %v1358, %v1356
    %v1383 = vpack.c.b16 %v1361, %v1359
    %v1384 = vpack.c.b16 %v1362, %v1360
    %v1385 = vpack.c.b16 %v1365, %v1363
    %v1386 = vpack.c.b16 %v1366, %v1364
    %v1387 = vpack.c.b16 %v1369, %v1367
    %v1388 = vpack.c.b16 %v1370, %v1368
    %v1389 = vpack.c.b16 %v1373, %v1371
    %v1390 = vpack.c.b16 %v1374, %v1372
    %1407 = vmatprep.subr.bf16.mxu0 %v1376
    %1408 = vmatpush1.bf16.msra.mxu0 %v1375
    %1409 = vmatprep.subr.bf16.mxu0 %v1378
    %1410 = vmatpush1.bf16.msra.mxu0 %v1377
    %1411 = vmatprep.subr.bf16.mxu0 %v1380
    %1412 = vmatpush1.bf16.msra.mxu0 %v1379
    %1413 = vmatprep.subr.bf16.mxu0 %v1382
    %1414 = vmatpush1.bf16.msra.mxu0 %v1381
    %1415 = vmatprep.subr.bf16.mxu0 %v1384
    %1416 = vmatpush1.bf16.msra.mxu0 %v1383
    %1417 = vmatprep.subr.bf16.mxu0 %v1386
    %1418 = vmatpush1.bf16.msra.mxu0 %v1385
    %1419 = vmatprep.subr.bf16.mxu0 %v1388
    %1420 = vmatpush1.bf16.msra.mxu0 %v1387
    %1421 = vmatprep.subr.bf16.mxu0 %v1390
    %1422 = vmatpush1.bf16.msra.mxu0 %v1389
    %1423 = vmatprep.subr.bf16.mxu0 0
    %1424 = vmatpush1.bf16.msra.mxu0 0
    %1425 = vmatprep.subr.bf16.mxu0 0
    %1426 = vmatpush1.bf16.msra.mxu0 0
    %1427 = vmatprep.subr.bf16.mxu0 0
    %1428 = vmatpush1.bf16.msra.mxu0 0
    %1429 = vmatprep.subr.bf16.mxu0 0
    %1430 = vmatpush1.bf16.msra.mxu0 0
    %1431 = vmatprep.subr.bf16.mxu0 0
    %1432 = vmatpush1.bf16.msra.mxu0 0
    %1433 = vmatprep.subr.bf16.mxu0 0
    %1434 = vmatpush1.bf16.msra.mxu0 0
    %1435 = vmatprep.subr.bf16.mxu0 0
    %1436 = vmatpush1.bf16.msra.mxu0 0
    %1437 = vmatprep.subr.bf16.mxu0 0
    %1438 = vmatpush1.bf16.msra.mxu0 0
    %1439 = vmatprep.mubr.bf16.mxu0 0
    %1440 = vmatmul.mubr.bf16.gmra.mrb[0].mxu0 %v1298
    %v1441 = vpop.f32.mrb[0].mxu0
    %v1442 = vadd.f32 %v1320, %v1441
    %v1443 = vpop.f32.mrb[0].mxu0
    %v1444 = vadd.f32 %v1324, %v1443
    %v1445 = vpop.f32.mrb[0].mxu0
    %v1446 = vpop.f32.mrb[0].mxu0
    %1447 = vdwg.mxu0
    %v1448 = vmax.f32 %v1442, 0.0
    %v1449 = vmax.f32 %v1444, 0.0
    %v1450 = vpack.c.bf16 %v1448, %v1448
    %v1451 = vpack.c.bf16 %v1449, %v1449
    %v1452 = vld [vmem:[#allocation16] sm:$0xf]
    %v1453 = vld [vmem:[#allocation16 + $0x4] sm:$0xf]
    %v1454 = vld [vmem:[#allocation16 + $0x8] sm:$0xf]
    %v1455 = vld [vmem:[#allocation16 + $0xc] sm:$0xf]
    %v1456 = vld [vmem:[#allocation16 + $0x10] sm:$0xf]
    %v1457 = vld [vmem:[#allocation16 + $0x14] sm:$0xf]
    %v1458 = vld [vmem:[#allocation16 + $0x18] sm:$0xf]
    %v1459 = vld [vmem:[#allocation16 + $0x1c] sm:$0xf]
    %v1460 = vld [vmem:[#allocation16 + $0x20] sm:$0xf]
    %v1461 = vld [vmem:[#allocation16 + $0x24] sm:$0xf]
    %v1462 = vld [vmem:[#allocation16 + $0x28] sm:$0xf]
    %v1463 = vld [vmem:[#allocation16 + $0x2c] sm:$0xf]
    %v1464 = vld [vmem:[#allocation16 + $0x30] sm:$0xf]
    %v1465 = vld [vmem:[#allocation16 + $0x34] sm:$0xf]
    %v1466 = vld [vmem:[#allocation16 + $0x38] sm:$0xf]
    %v1467 = vld [vmem:[#allocation16 + $0x3c] sm:$0xf]
    %v1468 = vld [vmem:[#allocation16 + $0x40] sm:$0xf]
    %v1469 = vld [vmem:[#allocation16 + $0x44] sm:$0xf]
    %v1470 = vld [vmem:[#allocation16 + $0x48] sm:$0xf]
    %v1471 = vld [vmem:[#allocation16 + $0x4c] sm:$0xf]
    %v1472 = vld [vmem:[#allocation16 + $0x50] sm:$0xf]
    %v1473 = vld [vmem:[#allocation16 + $0x54] sm:$0xf]
    %v1474 = vld [vmem:[#allocation16 + $0x58] sm:$0xf]
    %v1475 = vld [vmem:[#allocation16 + $0x5c] sm:$0xf]
    %v1476 = vld [vmem:[#allocation16 + $0x60] sm:$0xf]
    %v1477 = vld [vmem:[#allocation16 + $0x64] sm:$0xf]
    %v1478 = vld [vmem:[#allocation16 + $0x68] sm:$0xf]
    %v1479 = vld [vmem:[#allocation16 + $0x6c] sm:$0xf]
    %v1480 = vld [vmem:[#allocation16 + $0x70] sm:$0xf]
    %v1481 = vld [vmem:[#allocation16 + $0x74] sm:$0xf]
    %v1482 = vld [vmem:[#allocation16 + $0x78] sm:$0xf]
    %v1483 = vld [vmem:[#allocation16 + $0x7c] sm:$0xf]
    %v1484 = vld [vmem:[%s35] sm:$0x1]
    %v1486 = vlaneseq
    %v1487 = vshrl.u32 %v1486, 7
    %v1488 = vsub.s32 0, %v1487
    %v1489 = vrot.slane %v1484, %v1488
    %v1523 = vunpack.c.l.b16 %v1452
    %v1524 = vunpack.c.l.b16 %v1453
    %v1525 = vunpack.c.l.b16 %v1454
    %v1526 = vunpack.c.l.b16 %v1455
    %v1527 = vunpack.c.l.b16 %v1456
    %v1528 = vunpack.c.l.b16 %v1457
    %v1529 = vunpack.c.l.b16 %v1458
    %v1530 = vunpack.c.l.b16 %v1459
    %v1531 = vunpack.c.l.b16 %v1460
    %v1532 = vunpack.c.l.b16 %v1461
    %v1533 = vunpack.c.l.b16 %v1462
    %v1534 = vunpack.c.l.b16 %v1463
    %v1535 = vunpack.c.l.b16 %v1464
    %v1536 = vunpack.c.l.b16 %v1465
    %v1537 = vunpack.c.l.b16 %v1466
    %v1538 = vunpack.c.l.b16 %v1467
    %v1539 = vunpack.c.l.b16 %v1468
    %v1540 = vunpack.c.l.b16 %v1469
    %v1541 = vunpack.c.l.b16 %v1470
    %v1542 = vunpack.c.l.b16 %v1471
    %v1543 = vunpack.c.l.b16 %v1472
    %v1544 = vunpack.c.l.b16 %v1473
    %v1545 = vunpack.c.l.b16 %v1474
    %v1546 = vunpack.c.l.b16 %v1475
    %v1547 = vunpack.c.l.b16 %v1476
    %v1548 = vunpack.c.l.b16 %v1477
    %v1549 = vunpack.c.l.b16 %v1478
    %v1550 = vunpack.c.l.b16 %v1479
    %v1551 = vunpack.c.l.b16 %v1480
    %v1552 = vunpack.c.l.b16 %v1481
    %v1553 = vunpack.c.l.b16 %v1482
    %v1554 = vunpack.c.l.b16 %v1483
    %v1555 = vpack.c.b16 %v1524, %v1523
    %v1556 = vpack.c.b16 %v1526, %v1525
    %v1557 = vpack.c.b16 %v1528, %v1527
    %v1558 = vpack.c.b16 %v1530, %v1529
    %v1559 = vpack.c.b16 %v1532, %v1531
    %v1560 = vpack.c.b16 %v1534, %v1533
    %v1561 = vpack.c.b16 %v1536, %v1535
    %v1562 = vpack.c.b16 %v1538, %v1537
    %v1563 = vpack.c.b16 %v1540, %v1539
    %v1564 = vpack.c.b16 %v1542, %v1541
    %v1565 = vpack.c.b16 %v1544, %v1543
    %v1566 = vpack.c.b16 %v1546, %v1545
    %v1567 = vpack.c.b16 %v1548, %v1547
    %v1568 = vpack.c.b16 %v1550, %v1549
    %v1569 = vpack.c.b16 %v1552, %v1551
    %v1570 = vpack.c.b16 %v1554, %v1553
    %1587 = vmatprep.subr.bf16.mxu0 0
    %1588 = vmatpush1.bf16.msra.mxu0 %v1555
    %1589 = vmatprep.subr.bf16.mxu0 0
    %1590 = vmatpush1.bf16.msra.mxu0 %v1556
    %1591 = vmatprep.subr.bf16.mxu0 0
    %1592 = vmatpush1.bf16.msra.mxu0 %v1557
    %1593 = vmatprep.subr.bf16.mxu0 0
    %1594 = vmatpush1.bf16.msra.mxu0 %v1558
    %1595 = vmatprep.subr.bf16.mxu0 0
    %1596 = vmatpush1.bf16.msra.mxu0 %v1559
    %1597 = vmatprep.subr.bf16.mxu0 0
    %1598 = vmatpush1.bf16.msra.mxu0 %v1560
    %1599 = vmatprep.subr.bf16.mxu0 0
    %1600 = vmatpush1.bf16.msra.mxu0 %v1561
    %1601 = vmatprep.subr.bf16.mxu0 0
    %1602 = vmatpush1.bf16.msra.mxu0 %v1562
    %1603 = vmatprep.subr.bf16.mxu0 0
    %1604 = vmatpush1.bf16.msra.mxu0 %v1563
    %1605 = vmatprep.subr.bf16.mxu0 0
    %1606 = vmatpush1.bf16.msra.mxu0 %v1564
    %1607 = vmatprep.subr.bf16.mxu0 0
    %1608 = vmatpush1.bf16.msra.mxu0 %v1565
    %1609 = vmatprep.subr.bf16.mxu0 0
    %1610 = vmatpush1.bf16.msra.mxu0 %v1566
    %1611 = vmatprep.subr.bf16.mxu0 0
    %1612 = vmatpush1.bf16.msra.mxu0 %v1567
    %1613 = vmatprep.subr.bf16.mxu0 0
    %1614 = vmatpush1.bf16.msra.mxu0 %v1568
    %1615 = vmatprep.subr.bf16.mxu0 0
    %1616 = vmatpush1.bf16.msra.mxu0 %v1569
    %1617 = vmatprep.subr.bf16.mxu0 0
    %1618 = vmatpush1.bf16.msra.mxu0 %v1570
    %1619 = vmatprep.mubr.bf16.mxu0 %v1451
    %1620 = vmatmul.mubr.bf16.gmra.mrb[0].mxu0 %v1450
    %v1621 = vpop.f32.mrb[0].mxu0
    %v1622 = vadd.f32 %v1489, %v1621
    %v1623 = vpop.f32.mrb[0].mxu0
    %v1624 = vpop.f32.mrb[0].mxu0
    %v1625 = vpop.f32.mrb[0].mxu0
    %1626 = vdwg.mxu0
    %v1627 = vpack.c.bf16 %v1297, %v1297
    %v1628 = vld [vmem:[#allocation18] sm:$0xff]
    %v1629 = vld [vmem:[#allocation18 + $0x8] sm:$0xff]
    %v1630 = vld [vmem:[#allocation18 + $0x10] sm:$0xff]
    %v1631 = vld [vmem:[#allocation18 + $0x18] sm:$0xff]
    %v1632 = vld [vmem:[#allocation18 + $0x20] sm:$0xff]
    %v1633 = vld [vmem:[#allocation18 + $0x28] sm:$0xff]
    %v1634 = vld [vmem:[#allocation18 + $0x30] sm:$0xff]
    %v1635 = vld [vmem:[#allocation18 + $0x38] sm:$0xff]
    %v1636 = vld [vmem:[#allocation18 + $0x40] sm:$0xff]
    %v1637 = vld [vmem:[#allocation18 + $0x48] sm:$0xff]
    %v1638 = vld [vmem:[#allocation18 + $0x50] sm:$0xff]
    %v1639 = vld [vmem:[#allocation18 + $0x58] sm:$0xff]
    %v1640 = vld [vmem:[#allocation18 + $0x60] sm:$0xff]
    %v1641 = vld [vmem:[#allocation18 + $0x68] sm:$0xff]
    %v1642 = vld [vmem:[#allocation18 + $0x70] sm:$0xff]
    %v1643 = vld [vmem:[#allocation18 + $0x78] sm:$0xff]
    %v1644 = vld [vmem:[%s39] sm:$0x3]
    %v1646 = vlaneseq
    %v1647 = vshrl.u32 %v1646, 7
    %v1648 = vsub.s32 0, %v1647
    %v1649 = vrot.slane %v1644, %v1648
    %v1650 = vlaneseq
    %v1651 = vshrl.u32 %v1650, 7
    %v1652 = vsub.s32 1, %v1651
    %v1653 = vrot.slane %v1644, %v1652
    %v1672 = vunpack.c.l.b16 %v1628
    %v1673 = vunpack.c.h.b16 %v1628
    %v1674 = vunpack.c.l.b16 %v1629
    %v1675 = vunpack.c.h.b16 %v1629
    %v1676 = vunpack.c.l.b16 %v1630
    %v1677 = vunpack.c.h.b16 %v1630
    %v1678 = vunpack.c.l.b16 %v1631
    %v1679 = vunpack.c.h.b16 %v1631
    %v1680 = vunpack.c.l.b16 %v1632
    %v1681 = vunpack.c.h.b16 %v1632
    %v1682 = vunpack.c.l.b16 %v1633
    %v1683 = vunpack.c.h.b16 %v1633
    %v1684 = vunpack.c.l.b16 %v1634
    %v1685 = vunpack.c.h.b16 %v1634
    %v1686 = vunpack.c.l.b16 %v1635
    %v1687 = vunpack.c.h.b16 %v1635
    %v1688 = vunpack.c.l.b16 %v1636
    %v1689 = vunpack.c.h.b16 %v1636
    %v1690 = vunpack.c.l.b16 %v1637
    %v1691 = vunpack.c.h.b16 %v1637
    %v1692 = vunpack.c.l.b16 %v1638
    %v1693 = vunpack.c.h.b16 %v1638
    %v1694 = vunpack.c.l.b16 %v1639
    %v1695 = vunpack.c.h.b16 %v1639
    %v1696 = vunpack.c.l.b16 %v1640
    %v1697 = vunpack.c.h.b16 %v1640
    %v1698 = vunpack.c.l.b16 %v1641
    %v1699 = vunpack.c.h.b16 %v1641
    %v1700 = vunpack.c.l.b16 %v1642
    %v1701 = vunpack.c.h.b16 %v1642
    %v1702 = vunpack.c.l.b16 %v1643
    %v1703 = vunpack.c.h.b16 %v1643
    %v1704 = vpack.c.b16 %v1674, %v1672
    %v1705 = vpack.c.b16 %v1675, %v1673
    %v1706 = vpack.c.b16 %v1678, %v1676
    %v1707 = vpack.c.b16 %v1679, %v1677
    %v1708 = vpack.c.b16 %v1682, %v1680
    %v1709 = vpack.c.b16 %v1683, %v1681
    %v1710 = vpack.c.b16 %v1686, %v1684
    %v1711 = vpack.c.b16 %v1687, %v1685
    %v1712 = vpack.c.b16 %v1690, %v1688
    %v1713 = vpack.c.b16 %v1691, %v1689
    %v1714 = vpack.c.b16 %v1694, %v1692
    %v1715 = vpack.c.b16 %v1695, %v1693
    %v1716 = vpack.c.b16 %v1698, %v1696
    %v1717 = vpack.c.b16 %v1699, %v1697
    %v1718 = vpack.c.b16 %v1702, %v1700
    %v1719 = vpack.c.b16 %v1703, %v1701
    %1736 = vmatprep.subr.bf16.mxu0 %v1705
    %1737 = vmatpush1.bf16.msra.mxu0 %v1704
    %1738 = vmatprep.subr.bf16.mxu0 %v1707
    %1739 = vmatpush1.bf16.msra.mxu0 %v1706
    %1740 = vmatprep.subr.bf16.mxu0 %v1709
    %1741 = vmatpush1.bf16.msra.mxu0 %v1708
    %1742 = vmatprep.subr.bf16.mxu0 %v1711
    %1743 = vmatpush1.bf16.msra.mxu0 %v1710
    %1744 = vmatprep.subr.bf16.mxu0 %v1713
    %1745 = vmatpush1.bf16.msra.mxu0 %v1712
    %1746 = vmatprep.subr.bf16.mxu0 %v1715
    %1747 = vmatpush1.bf16.msra.mxu0 %v1714
    %1748 = vmatprep.subr.bf16.mxu0 %v1717
    %1749 = vmatpush1.bf16.msra.mxu0 %v1716
    %1750 = vmatprep.subr.bf16.mxu0 %v1719
    %1751 = vmatpush1.bf16.msra.mxu0 %v1718
    %1752 = vmatprep.subr.bf16.mxu0 0
    %1753 = vmatpush1.bf16.msra.mxu0 0
    %1754 = vmatprep.subr.bf16.mxu0 0
    %1755 = vmatpush1.bf16.msra.mxu0 0
    %1756 = vmatprep.subr.bf16.mxu0 0
    %1757 = vmatpush1.bf16.msra.mxu0 0
    %1758 = vmatprep.subr.bf16.mxu0 0
    %1759 = vmatpush1.bf16.msra.mxu0 0
    %1760 = vmatprep.subr.bf16.mxu0 0
    %1761 = vmatpush1.bf16.msra.mxu0 0
    %1762 = vmatprep.subr.bf16.mxu0 0
    %1763 = vmatpush1.bf16.msra.mxu0 0
    %1764 = vmatprep.subr.bf16.mxu0 0
    %1765 = vmatpush1.bf16.msra.mxu0 0
    %1766 = vmatprep.subr.bf16.mxu0 0
    %1767 = vmatpush1.bf16.msra.mxu0 0
    %1768 = vmatprep.mubr.bf16.mxu0 0
    %1769 = vmatmul.mubr.bf16.gmra.mrb[0].mxu0 %v1627
    %v1770 = vpop.f32.mrb[0].mxu0
    %v1771 = vadd.f32 %v1649, %v1770
    %v1772 = vpop.f32.mrb[0].mxu0
    %v1773 = vadd.f32 %v1653, %v1772
    %v1774 = vpop.f32.mrb[0].mxu0
    %v1775 = vpop.f32.mrb[0].mxu0
    %1776 = vdwg.mxu0
    %v1777 = vmax.f32 %v1771, 0.0
    %v1778 = vmax.f32 %v1773, 0.0
    %v1779 = vpack.c.bf16 %v1777, %v1777
    %v1780 = vpack.c.bf16 %v1778, %v1778
    %v1781 = vld [vmem:[#allocation19] sm:$0xf]
    %v1782 = vld [vmem:[#allocation19 + $0x4] sm:$0xf]
    %v1783 = vld [vmem:[#allocation19 + $0x8] sm:$0xf]
    %v1784 = vld [vmem:[#allocation19 + $0xc] sm:$0xf]
    %v1785 = vld [vmem:[#allocation19 + $0x10] sm:$0xf]
    %v1786 = vld [vmem:[#allocation19 + $0x14] sm:$0xf]
    %v1787 = vld [vmem:[#allocation19 + $0x18] sm:$0xf]
    %v1788 = vld [vmem:[#allocation19 + $0x1c] sm:$0xf]
    %v1789 = vld [vmem:[#allocation19 + $0x20] sm:$0xf]
    %v1790 = vld [vmem:[#allocation19 + $0x24] sm:$0xf]
    %v1791 = vld [vmem:[#allocation19 + $0x28] sm:$0xf]
    %v1792 = vld [vmem:[#allocation19 + $0x2c] sm:$0xf]
    %v1793 = vld [vmem:[#allocation19 + $0x30] sm:$0xf]
    %v1794 = vld [vmem:[#allocation19 + $0x34] sm:$0xf]
    %v1795 = vld [vmem:[#allocation19 + $0x38] sm:$0xf]
    %v1796 = vld [vmem:[#allocation19 + $0x3c] sm:$0xf]
    %v1797 = vld [vmem:[#allocation19 + $0x40] sm:$0xf]
    %v1798 = vld [vmem:[#allocation19 + $0x44] sm:$0xf]
    %v1799 = vld [vmem:[#allocation19 + $0x48] sm:$0xf]
    %v1800 = vld [vmem:[#allocation19 + $0x4c] sm:$0xf]
    %v1801 = vld [vmem:[#allocation19 + $0x50] sm:$0xf]
    %v1802 = vld [vmem:[#allocation19 + $0x54] sm:$0xf]
    %v1803 = vld [vmem:[#allocation19 + $0x58] sm:$0xf]
    %v1804 = vld [vmem:[#allocation19 + $0x5c] sm:$0xf]
    %v1805 = vld [vmem:[#allocation19 + $0x60] sm:$0xf]
    %v1806 = vld [vmem:[#allocation19 + $0x64] sm:$0xf]
    %v1807 = vld [vmem:[#allocation19 + $0x68] sm:$0xf]
    %v1808 = vld [vmem:[#allocation19 + $0x6c] sm:$0xf]
    %v1809 = vld [vmem:[#allocation19 + $0x70] sm:$0xf]
    %v1810 = vld [vmem:[#allocation19 + $0x74] sm:$0xf]
    %v1811 = vld [vmem:[#allocation19 + $0x78] sm:$0xf]
    %v1812 = vld [vmem:[#allocation19 + $0x7c] sm:$0xf]
    %v1813 = vld [vmem:[%s43] sm:$0x1]
    %v1815 = vlaneseq
    %v1816 = vshrl.u32 %v1815, 7
    %v1817 = vsub.s32 0, %v1816
    %v1818 = vrot.slane %v1813, %v1817
    %v1852 = vunpack.c.l.b16 %v1781
    %v1853 = vunpack.c.l.b16 %v1782
    %v1854 = vunpack.c.l.b16 %v1783
    %v1855 = vunpack.c.l.b16 %v1784
    %v1856 = vunpack.c.l.b16 %v1785
    %v1857 = vunpack.c.l.b16 %v1786
    %v1858 = vunpack.c.l.b16 %v1787
    %v1859 = vunpack.c.l.b16 %v1788
    %v1860 = vunpack.c.l.b16 %v1789
    %v1861 = vunpack.c.l.b16 %v1790
    %v1862 = vunpack.c.l.b16 %v1791
    %v1863 = vunpack.c.l.b16 %v1792
    %v1864 = vunpack.c.l.b16 %v1793
    %v1865 = vunpack.c.l.b16 %v1794
    %v1866 = vunpack.c.l.b16 %v1795
    %v1867 = vunpack.c.l.b16 %v1796
    %v1868 = vunpack.c.l.b16 %v1797
    %v1869 = vunpack.c.l.b16 %v1798
    %v1870 = vunpack.c.l.b16 %v1799
    %v1871 = vunpack.c.l.b16 %v1800
    %v1872 = vunpack.c.l.b16 %v1801
    %v1873 = vunpack.c.l.b16 %v1802
    %v1874 = vunpack.c.l.b16 %v1803
    %v1875 = vunpack.c.l.b16 %v1804
    %v1876 = vunpack.c.l.b16 %v1805
    %v1877 = vunpack.c.l.b16 %v1806
    %v1878 = vunpack.c.l.b16 %v1807
    %v1879 = vunpack.c.l.b16 %v1808
    %v1880 = vunpack.c.l.b16 %v1809
    %v1881 = vunpack.c.l.b16 %v1810
    %v1882 = vunpack.c.l.b16 %v1811
    %v1883 = vunpack.c.l.b16 %v1812
    %v1884 = vpack.c.b16 %v1853, %v1852
    %v1885 = vpack.c.b16 %v1855, %v1854
    %v1886 = vpack.c.b16 %v1857, %v1856
    %v1887 = vpack.c.b16 %v1859, %v1858
    %v1888 = vpack.c.b16 %v1861, %v1860
    %v1889 = vpack.c.b16 %v1863, %v1862
    %v1890 = vpack.c.b16 %v1865, %v1864
    %v1891 = vpack.c.b16 %v1867, %v1866
    %v1892 = vpack.c.b16 %v1869, %v1868
    %v1893 = vpack.c.b16 %v1871, %v1870
    %v1894 = vpack.c.b16 %v1873, %v1872
    %v1895 = vpack.c.b16 %v1875, %v1874
    %v1896 = vpack.c.b16 %v1877, %v1876
    %v1897 = vpack.c.b16 %v1879, %v1878
    %v1898 = vpack.c.b16 %v1881, %v1880
    %v1899 = vpack.c.b16 %v1883, %v1882
    %1916 = vmatprep.subr.bf16.mxu0 0
    %1917 = vmatpush1.bf16.msra.mxu0 %v1884
    %1918 = vmatprep.subr.bf16.mxu0 0
    %1919 = vmatpush1.bf16.msra.mxu0 %v1885
    %1920 = vmatprep.subr.bf16.mxu0 0
    %1921 = vmatpush1.bf16.msra.mxu0 %v1886
    %1922 = vmatprep.subr.bf16.mxu0 0
    %1923 = vmatpush1.bf16.msra.mxu0 %v1887
    %1924 = vmatprep.subr.bf16.mxu0 0
    %1925 = vmatpush1.bf16.msra.mxu0 %v1888
    %1926 = vmatprep.subr.bf16.mxu0 0
    %1927 = vmatpush1.bf16.msra.mxu0 %v1889
    %1928 = vmatprep.subr.bf16.mxu0 0
    %1929 = vmatpush1.bf16.msra.mxu0 %v1890
    %1930 = vmatprep.subr.bf16.mxu0 0
    %1931 = vmatpush1.bf16.msra.mxu0 %v1891
    %1932 = vmatprep.subr.bf16.mxu0 0
    %1933 = vmatpush1.bf16.msra.mxu0 %v1892
    %1934 = vmatprep.subr.bf16.mxu0 0
    %1935 = vmatpush1.bf16.msra.mxu0 %v1893
    %1936 = vmatprep.subr.bf16.mxu0 0
    %1937 = vmatpush1.bf16.msra.mxu0 %v1894
    %1938 = vmatprep.subr.bf16.mxu0 0
    %1939 = vmatpush1.bf16.msra.mxu0 %v1895
    %1940 = vmatprep.subr.bf16.mxu0 0
    %1941 = vmatpush1.bf16.msra.mxu0 %v1896
    %1942 = vmatprep.subr.bf16.mxu0 0
    %1943 = vmatpush1.bf16.msra.mxu0 %v1897
    %1944 = vmatprep.subr.bf16.mxu0 0
    %1945 = vmatpush1.bf16.msra.mxu0 %v1898
    %1946 = vmatprep.subr.bf16.mxu0 0
    %1947 = vmatpush1.bf16.msra.mxu0 %v1899
    %1948 = vmatprep.mubr.bf16.mxu0 %v1780
    %1949 = vmatmul.mubr.bf16.gmra.mrb[0].mxu0 %v1779
    %v1950 = vpop.f32.mrb[0].mxu0
    %v1951 = vadd.f32 %v1818, %v1950
    %v1952 = vpop.f32.mrb[0].mxu0
    %v1953 = vpop.f32.mrb[0].mxu0
    %v1954 = vpop.f32.mrb[0].mxu0
    %1955 = vdwg.mxu0
    %v1956 = vmax.f32 %v1622, 0.0
    %v1957 = vpack.c.bf16 %v1956, %v1956
    %v1958 = vld [vmem:[#allocation21] sm:$0xf]
    %v1959 = vld [vmem:[#allocation21 + $0x4] sm:$0xf]
    %v1960 = vld [vmem:[#allocation21 + $0x8] sm:$0xf]
    %v1961 = vld [vmem:[#allocation21 + $0xc] sm:$0xf]
    %v1962 = vld [vmem:[#allocation21 + $0x10] sm:$0xf]
    %v1963 = vld [vmem:[#allocation21 + $0x14] sm:$0xf]
    %v1964 = vld [vmem:[#allocation21 + $0x18] sm:$0xf]
    %v1965 = vld [vmem:[#allocation21 + $0x1c] sm:$0xf]
    %v1966 = vld [vmem:[#allocation21 + $0x20] sm:$0xf]
    %v1967 = vld [vmem:[#allocation21 + $0x24] sm:$0xf]
    %v1968 = vld [vmem:[#allocation21 + $0x28] sm:$0xf]
    %v1969 = vld [vmem:[#allocation21 + $0x2c] sm:$0xf]
    %v1970 = vld [vmem:[#allocation21 + $0x30] sm:$0xf]
    %v1971 = vld [vmem:[#allocation21 + $0x34] sm:$0xf]
    %v1972 = vld [vmem:[#allocation21 + $0x38] sm:$0xf]
    %v1973 = vld [vmem:[#allocation21 + $0x3c] sm:$0xf]
    %v1974 = vmax.f32 %v1951, 0.0
    %v1975 = vpack.c.bf16 %v1974, %v1974
    %v1976 = vld [vmem:[#allocation22] sm:$0xf]
    %v1977 = vld [vmem:[#allocation22 + $0x4] sm:$0xf]
    %v1978 = vld [vmem:[#allocation22 + $0x8] sm:$0xf]
    %v1979 = vld [vmem:[#allocation22 + $0xc] sm:$0xf]
    %v1980 = vld [vmem:[#allocation22 + $0x10] sm:$0xf]
    %v1981 = vld [vmem:[#allocation22 + $0x14] sm:$0xf]
    %v1982 = vld [vmem:[#allocation22 + $0x18] sm:$0xf]
    %v1983 = vld [vmem:[#allocation22 + $0x1c] sm:$0xf]
    %v1984 = vld [vmem:[#allocation22 + $0x20] sm:$0xf]
    %v1985 = vld [vmem:[#allocation22 + $0x24] sm:$0xf]
    %v1986 = vld [vmem:[#allocation22 + $0x28] sm:$0xf]
    %v1987 = vld [vmem:[#allocation22 + $0x2c] sm:$0xf]
    %v1988 = vld [vmem:[#allocation22 + $0x30] sm:$0xf]
    %v1989 = vld [vmem:[#allocation22 + $0x34] sm:$0xf]
    %v1990 = vld [vmem:[#allocation22 + $0x38] sm:$0xf]
    %v1991 = vld [vmem:[#allocation22 + $0x3c] sm:$0xf]
    %v2008 = vunpack.c.l.b16 %v1976
    %v2009 = vunpack.c.l.b16 %v1977
    %v2010 = vunpack.c.l.b16 %v1978
    %v2011 = vunpack.c.l.b16 %v1979
    %v2012 = vunpack.c.l.b16 %v1980
    %v2013 = vunpack.c.l.b16 %v1981
    %v2014 = vunpack.c.l.b16 %v1982
    %v2015 = vunpack.c.l.b16 %v1983
    %v2016 = vunpack.c.l.b16 %v1984
    %v2017 = vunpack.c.l.b16 %v1985
    %v2018 = vunpack.c.l.b16 %v1986
    %v2019 = vunpack.c.l.b16 %v1987
    %v2020 = vunpack.c.l.b16 %v1988
    %v2021 = vunpack.c.l.b16 %v1989
    %v2022 = vunpack.c.l.b16 %v1990
    %v2023 = vunpack.c.l.b16 %v1991
    %v2024 = vpack.c.b16 %v2009, %v2008
    %v2025 = vpack.c.b16 %v2011, %v2010
    %v2026 = vpack.c.b16 %v2013, %v2012
    %v2027 = vpack.c.b16 %v2015, %v2014
    %v2028 = vpack.c.b16 %v2017, %v2016
    %v2029 = vpack.c.b16 %v2019, %v2018
    %v2030 = vpack.c.b16 %v2021, %v2020
    %v2031 = vpack.c.b16 %v2023, %v2022
    %2040 = vmatprep.subr.bf16.mxu0 0
    %2041 = vmatpush1.bf16.msra.mxu0 %v2024
    %2042 = vmatprep.subr.bf16.mxu0 0
    %2043 = vmatpush1.bf16.msra.mxu0 %v2025
    %2044 = vmatprep.subr.bf16.mxu0 0
    %2045 = vmatpush1.bf16.msra.mxu0 %v2026
    %2046 = vmatprep.subr.bf16.mxu0 0
    %2047 = vmatpush1.bf16.msra.mxu0 %v2027
    %2048 = vmatprep.subr.bf16.mxu0 0
    %2049 = vmatpush1.bf16.msra.mxu0 %v2028
    %2050 = vmatprep.subr.bf16.mxu0 0
    %2051 = vmatpush1.bf16.msra.mxu0 %v2029
    %2052 = vmatprep.subr.bf16.mxu0 0
    %2053 = vmatpush1.bf16.msra.mxu0 %v2030
    %2054 = vmatprep.subr.bf16.mxu0 0
    %2055 = vmatpush1.bf16.msra.mxu0 %v2031
    %2056 = vmatprep.subr.bf16.mxu0 0
    %2057 = vmatpush1.bf16.msra.mxu0 0
    %2058 = vmatprep.subr.bf16.mxu0 0
    %2059 = vmatpush1.bf16.msra.mxu0 0
    %2060 = vmatprep.subr.bf16.mxu0 0
    %2061 = vmatpush1.bf16.msra.mxu0 0
    %2062 = vmatprep.subr.bf16.mxu0 0
    %2063 = vmatpush1.bf16.msra.mxu0 0
    %2064 = vmatprep.subr.bf16.mxu0 0
    %2065 = vmatpush1.bf16.msra.mxu0 0
    %2066 = vmatprep.subr.bf16.mxu0 0
    %2067 = vmatpush1.bf16.msra.mxu0 0
    %2068 = vmatprep.subr.bf16.mxu0 0
    %2069 = vmatpush1.bf16.msra.mxu0 0
    %2070 = vmatprep.subr.bf16.mxu0 0
    %2071 = vmatpush1.bf16.msra.mxu0 0
    %2072 = vmatprep.mubr.bf16.mxu0 0
    %2073 = vmatmul.mubr.bf16.gmra.mrb[0].mxu0 %v1975
    %v2074 = vpop.f32.mrb[0].mxu0
    %v2075 = vadd.f32 0.0, %v2074
    %v2076 = vpop.f32.mrb[0].mxu0
    %v2077 = vpop.f32.mrb[0].mxu0
    %v2078 = vpop.f32.mrb[0].mxu0
    %2079 = vdwg.mxu0
    %v2096 = vunpack.c.l.b16 %v1958
    %v2097 = vunpack.c.l.b16 %v1959
    %v2098 = vunpack.c.l.b16 %v1960
    %v2099 = vunpack.c.l.b16 %v1961
    %v2100 = vunpack.c.l.b16 %v1962
    %v2101 = vunpack.c.l.b16 %v1963
    %v2102 = vunpack.c.l.b16 %v1964
    %v2103 = vunpack.c.l.b16 %v1965
    %v2104 = vunpack.c.l.b16 %v1966
    %v2105 = vunpack.c.l.b16 %v1967
    %v2106 = vunpack.c.l.b16 %v1968
    %v2107 = vunpack.c.l.b16 %v1969
    %v2108 = vunpack.c.l.b16 %v1970
    %v2109 = vunpack.c.l.b16 %v1971
    %v2110 = vunpack.c.l.b16 %v1972
    %v2111 = vunpack.c.l.b16 %v1973
    %v2112 = vpack.c.b16 %v2097, %v2096
    %v2113 = vpack.c.b16 %v2099, %v2098
    %v2114 = vpack.c.b16 %v2101, %v2100
    %v2115 = vpack.c.b16 %v2103, %v2102
    %v2116 = vpack.c.b16 %v2105, %v2104
    %v2117 = vpack.c.b16 %v2107, %v2106
    %v2118 = vpack.c.b16 %v2109, %v2108
    %v2119 = vpack.c.b16 %v2111, %v2110
    %2128 = vmatprep.subr.bf16.mxu0 0
    %2129 = vmatpush1.bf16.msra.mxu0 %v2112
    %2130 = vmatprep.subr.bf16.mxu0 0
    %2131 = vmatpush1.bf16.msra.mxu0 %v2113
    %2132 = vmatprep.subr.bf16.mxu0 0
    %2133 = vmatpush1.bf16.msra.mxu0 %v2114
    %2134 = vmatprep.subr.bf16.mxu0 0
    %2135 = vmatpush1.bf16.msra.mxu0 %v2115
    %2136 = vmatprep.subr.bf16.mxu0 0
    %2137 = vmatpush1.bf16.msra.mxu0 %v2116
    %2138 = vmatprep.subr.bf16.mxu0 0
    %2139 = vmatpush1.bf16.msra.mxu0 %v2117
    %2140 = vmatprep.subr.bf16.mxu0 0
    %2141 = vmatpush1.bf16.msra.mxu0 %v2118
    %2142 = vmatprep.subr.bf16.mxu0 0
    %2143 = vmatpush1.bf16.msra.mxu0 %v2119
    %2144 = vmatprep.subr.bf16.mxu0 0
    %2145 = vmatpush1.bf16.msra.mxu0 0
    %2146 = vmatprep.subr.bf16.mxu0 0
    %2147 = vmatpush1.bf16.msra.mxu0 0
    %2148 = vmatprep.subr.bf16.mxu0 0
    %2149 = vmatpush1.bf16.msra.mxu0 0
    %2150 = vmatprep.subr.bf16.mxu0 0
    %2151 = vmatpush1.bf16.msra.mxu0 0
    %2152 = vmatprep.subr.bf16.mxu0 0
    %2153 = vmatpush1.bf16.msra.mxu0 0
    %2154 = vmatprep.subr.bf16.mxu0 0
    %2155 = vmatpush1.bf16.msra.mxu0 0
    %2156 = vmatprep.subr.bf16.mxu0 0
    %2157 = vmatpush1.bf16.msra.mxu0 0
    %2158 = vmatprep.subr.bf16.mxu0 0
    %2159 = vmatpush1.bf16.msra.mxu0 0
    %2160 = vmatprep.mubr.bf16.mxu0 0
    %2161 = vmatmul.mubr.bf16.gmra.mrb[0].mxu0 %v1957
    %v2162 = vpop.f32.mrb[0].mxu0
    %v2163 = vadd.f32 %v2075, %v2162
    %v2164 = vpop.f32.mrb[0].mxu0
    %v2165 = vpop.f32.mrb[0].mxu0
    %v2166 = vpop.f32.mrb[0].mxu0
    %2167 = vdwg.mxu0
    %v2168 = vld [vmem:[#allocation24] sm:$0x1]
    %v2170 = vlaneseq
    %v2171 = vshrl.u32 %v2170, 7
    %v2172 = vsub.s32 0, %v2171
    %v2173 = vrot.slane %v2168, %v2172
    %v2175 = vadd.f32 %v2163, %v2173
    %2176 = vst [vmem:[%s51] sm:$0xff] %v734
    %2177 = vst [vmem:[%s53] sm:$0xff] %v2175
    %2178 = vst [vmem:[%s55] sm:$0xff] %v1295
    %2179 = vst [vmem:[%s57] sm:$0xff] %v1174
    %2180 = vst [vmem:[%s59] sm:$0xff] %v889
    %2181 = vst [vmem:[%s59 + $0x8] sm:$0xff] %v890
    // Predicated region
    $region162: #{mlp_oneway_att_confuse_forward.1} parent=1 // pred_check
      _
    $region163: #{mlp_oneway_att_confuse_forward.1} parent=1 // pred_check_branch
      %2183 = sbr.rel (0) target = $region165
    $region164: #{mlp_oneway_att_confuse_forward.1} parent=1 // pred_region
      _
    $region165: #{mlp_oneway_att_confuse_forward.1} parent=1 // pred_fallthru
      _
    // Predicated region
    $region166: #{mlp_oneway_att_confuse_forward.1} parent=1 // pred_check
      _
    $region167: #{mlp_oneway_att_confuse_forward.1} parent=1 // pred_check_branch
      %2185 = sbr.rel (0) target = $region169
    $region168: #{mlp_oneway_att_confuse_forward.1} parent=1 // pred_region
      _
    $region169: #{mlp_oneway_att_confuse_forward.1} parent=1 // pred_fallthru
      _
    // Predicated region
    $region170: #{mlp_oneway_att_confuse_forward.1} parent=1 // pred_check
      _
    $region171: #{mlp_oneway_att_confuse_forward.1} parent=1 // pred_check_branch
      %2187 = sbr.rel (0) target = $region173
    $region172: #{mlp_oneway_att_confuse_forward.1} parent=1 // pred_region
      _
    $region173: #{mlp_oneway_att_confuse_forward.1} parent=1 // pred_fallthru
      _
    // Predicated region
    $region174: #{mlp_oneway_att_confuse_forward.1} parent=1 // pred_check
      _
    $region175: #{mlp_oneway_att_confuse_forward.1} parent=1 // pred_check_branch
      %2189 = sbr.rel (0) target = $region177
    $region176: #{mlp_oneway_att_confuse_forward.1} parent=1 // pred_region
      _
    $region177: #{mlp_oneway_att_confuse_forward.1} parent=1 // pred_fallthru
      _
    // Predicated region
    $region178: #{mlp_oneway_att_confuse_forward.1} parent=1 // pred_check
      _
    $region179: #{mlp_oneway_att_confuse_forward.1} parent=1 // pred_check_branch
      %2191 = sbr.rel (0) target = $region181
    $region180: #{mlp_oneway_att_confuse_forward.1} parent=1 // pred_region
      _
    $region181: #{mlp_oneway_att_confuse_forward.1} parent=1 // pred_fallthru
      _
    // Predicated region
    $region182: #{mlp_oneway_att_confuse_forward.1} parent=1 // pred_check
      _
    $region183: #{mlp_oneway_att_confuse_forward.1} parent=1 // pred_check_branch
      %2193 = sbr.rel (0) target = $region185
    $region184: #{mlp_oneway_att_confuse_forward.1} parent=1 // pred_region
      _
    $region185: #{mlp_oneway_att_confuse_forward.1} parent=1 // pred_fallthru
      _
    // Predicated region
    $region186: #{mlp_oneway_att_confuse_forward.1} parent=1 // pred_check
      _
    $region187: #{mlp_oneway_att_confuse_forward.1} parent=1 // pred_check_branch
      %2195 = sbr.rel (0) target = $region189
    $region188: #{mlp_oneway_att_confuse_forward.1} parent=1 // pred_region
      _
    $region189: #{mlp_oneway_att_confuse_forward.1} parent=1 // pred_fallthru
      _
    // Predicated region
    $region190: #{mlp_oneway_att_confuse_forward.1} parent=1 // pred_check
      _
    $region191: #{mlp_oneway_att_confuse_forward.1} parent=1 // pred_check_branch
      %2197 = sbr.rel (0) target = $region193
    $region192: #{mlp_oneway_att_confuse_forward.1} parent=1 // pred_region
      _
    $region193: #{mlp_oneway_att_confuse_forward.1} parent=1 // pred_fallthru
      _
    // Predicated region
    $region194: #{mlp_oneway_att_confuse_forward.1} parent=1 // pred_check
      _
    $region195: #{mlp_oneway_att_confuse_forward.1} parent=1 // pred_check_branch
      %2199 = sbr.rel (0) target = $region197
    $region196: #{mlp_oneway_att_confuse_forward.1} parent=1 // pred_region
      _
    $region197: #{mlp_oneway_att_confuse_forward.1} parent=1 // pred_fallthru
      _
    // Predicated region
    $region198: #{mlp_oneway_att_confuse_forward.1} parent=1 // pred_check
      _
    $region199: #{mlp_oneway_att_confuse_forward.1} parent=1 // pred_check_branch
      %2201 = sbr.rel (0) target = $region201
    $region200: #{mlp_oneway_att_confuse_forward.1} parent=1 // pred_region
      _
    $region201: #{mlp_oneway_att_confuse_forward.1} parent=1 // pred_fallthru
      _
    %2202 = vsyncpa [#allocation3], 1
    %2203 = vsyncpa [#allocation5], 1
    %2204 = vsyncpa [#allocation8], 1
    %2205 = vsyncpa [#allocation11], 1
    %2206 = vsyncpa [#allocation14], 1
    %2207 = vsyncpa [#allocation17], 1
    %2208 = vsyncpa [#allocation20], 1
    %2209 = vsyncpa [#allocation23], 1

</llo_original>
